<compile_context>
chip_gen: v7x
topology: tpu7x:2x2x1
jax: 0.10.0
libtpu: 0.0.40
codegen_flags: <defaults>
</compile_context>

<pallas_src>
import jax
import jax.numpy as jnp
from jax.experimental import pallas as pl
from jax.experimental.pallas import tpu as pltpu


def _classifier_kernel(x_ref, w1_ref, b1_ref, w2_ref, b2_ref, o_ref):
    # fc1: x[tb, in] @ w1[in, hidden]  (canonical MXU feed, f32 accumulate)
    h = jnp.dot(x_ref[...], w1_ref[...], preferred_element_type=jnp.float32)
    h = jnp.maximum(h + b1_ref[...], 0.0)                       # bias + ReLU

    # fc2: h[tb, hidden] @ w2[hidden, C] -> logits[tb, C]
    logits = jnp.dot(h, w2_ref[...], preferred_element_type=jnp.float32)
    logits = logits + b2_ref[...]

    # Numerically stable softmax over the class axis (== PyTorch dim=1).
    m = jnp.max(logits, axis=-1, keepdims=True)
    e = jnp.exp(logits - m)
    denom = jnp.sum(e, axis=-1, keepdims=True)
    o_ref[...] = (e / denom).astype(o_ref.dtype)                # exact division


def prepare_classifier_params(w1, b1, w2, b2):
    """One-time (init-side) parameter prep.

    Transposes the PyTorch [out, in] weights once so the kernel's matmuls are
    canonical [M,K] x [K,N] (no per-call / per-step transposes), and reshapes
    biases to 2-D rows for broadcasting inside the kernel.
    """
    hidden, in_size = w1.shape
    num_classes = w2.shape[0]
    return dict(
        w1=jnp.asarray(w1).T,                       # [in, hidden]
        b1=jnp.asarray(b1).reshape(1, hidden),      # [1, hidden]
        w2=jnp.asarray(w2).T,                       # [hidden, num_classes]
        b2=jnp.asarray(b2).reshape(1, num_classes), # [1, num_classes]
    )


def simple_classifier(x, params, *, block_b=None):
    """Forward pass.  x: [B, input_size] float32; params from prepare_classifier_params.

    block_b=None -> one grid step over the whole batch (best on single-TC
    v5e/v6e).  On v7x pass block_b = B // 2 (multiple of 8, dividing B) so the
    "parallel" grid axis splits the batch across the two TensorCores.
    """
    w1, b1, w2, b2 = params["w1"], params["b1"], params["w2"], params["b2"]
    B, in_size = x.shape
    hidden = w1.shape[1]
    num_classes = w2.shape[1]

    # Batch tile selection: never pad the batch — require an exact divisor
    # (multiple of 8 for the (8,128) block rule), otherwise run one full step.
    if block_b is None or block_b >= B or B % block_b != 0 or block_b % 8 != 0:
        tb = B
    else:
        tb = block_b
    grid_b = B // tb

    itemsize = jnp.dtype(x.dtype).itemsize
    cost = pl.CostEstimate(
        flops=2 * B * (in_size * hidden + hidden * num_classes),
        transcendentals=B * num_classes,                         # exp
        bytes_accessed=itemsize * (x.size + w1.size + b1.size + w2.size
                                   + b2.size + B * num_classes),
    )

    return pl.pallas_call(
        _classifier_kernel,
        out_shape=jax.ShapeDtypeStruct((B, num_classes), x.dtype),
        grid=(grid_b,),
        in_specs=[
            pl.BlockSpec((tb, in_size), lambda i: (i, 0)),        # x: tiled on batch
            pl.BlockSpec((in_size, hidden), lambda i: (0, 0)),    # w1: VMEM-resident
            pl.BlockSpec((1, hidden), lambda i: (0, 0)),          # b1: VMEM-resident
            pl.BlockSpec((hidden, num_classes), lambda i: (0, 0)),# w2: VMEM-resident
            pl.BlockSpec((1, num_classes), lambda i: (0, 0)),     # b2: VMEM-resident
        ],
        out_specs=pl.BlockSpec((tb, num_classes), lambda i: (i, 0)),
        compiler_params=pltpu.CompilerParams(
            dimension_semantics=("parallel",),   # megacore split when grid_b > 1 (v7x)
        ),
        cost_estimate=cost,
    )(x, w1, b1, w2, b2)


if __name__ == "__main__":
    # Shapes consistent with the module: input_size=32, hidden_size=64,
    # num_classes=16, batch=512.
    B, INPUT, HIDDEN, CLASSES = 512, 32, 64, 16

    key = jax.random.PRNGKey(0)
    kx, kw1, kb1, kw2, kb2 = jax.random.split(key, 5)

    x = jax.random.normal(kx, (B, INPUT), dtype=jnp.float32)
    # PyTorch nn.Linear layout: weight [out, in], bias [out].
    w1 = jax.random.normal(kw1, (HIDDEN, INPUT), dtype=jnp.float32) * (1.0 / INPUT ** 0.5)
    b1 = jax.random.normal(kb1, (HIDDEN,), dtype=jnp.float32) * 0.01
    w2 = jax.random.normal(kw2, (CLASSES, HIDDEN), dtype=jnp.float32) * (1.0 / HIDDEN ** 0.5)
    b2 = jax.random.normal(kb2, (CLASSES,), dtype=jnp.float32) * 0.01

    params = prepare_classifier_params(w1, b1, w2, b2)   # one-time init-side prep

    # Default path: single grid step (v5e/v6e-friendly).
    out = jax.block_until_ready(simple_classifier(x, params))
    # Two-way batch-parallel path (what you'd use on v7x's 2 TensorCores).
    out2 = jax.block_until_ready(simple_classifier(x, params, block_b=B // 2))

    # Reference in plain JAX (highest precision so the f32 comparison is fair).
    hp = jax.lax.Precision.HIGHEST
    h_ref = jnp.maximum(jnp.dot(x, w1.T, precision=hp) + b1, 0.0)
    logits_ref = jnp.dot(h_ref, w2.T, precision=hp) + b2
    ref = jax.nn.softmax(logits_ref, axis=1)

    assert out.shape == (B, CLASSES)
    assert jnp.allclose(out, ref, atol=1e-4, rtol=1e-4), float(jnp.max(jnp.abs(out - ref)))
    assert jnp.allclose(out2, ref, atol=1e-4, rtol=1e-4), float(jnp.max(jnp.abs(out2 - ref)))
    assert jnp.allclose(jnp.sum(out, axis=1), 1.0, atol=1e-5)

    print("KERNEL_OK")
</pallas_src>

<mosaic_0001>
module attributes {stable_mosaic.version = 11 : i64} {
  func.func @_classifier_kernel(%arg0: i32, %arg1: memref<512x32xf32, #tpu.memory_space<vmem>>, %arg2: memref<32x64xf32, #tpu.memory_space<vmem>>, %arg3: memref<1x64xf32, #tpu.memory_space<vmem>>, %arg4: memref<64x16xf32, #tpu.memory_space<vmem>>, %arg5: memref<1x16xf32, #tpu.memory_space<vmem>>, %arg6: memref<512x16xf32, #tpu.memory_space<vmem>>) attributes {dimension_semantics = [#tpu.dimension_semantics<parallel>], iteration_bounds = array<i64: 1>, scalar_prefetch = 0 : i64, scratch_operands = 0 : i64, tpu.core_type = #tpu.core_type<tc>, window_params = [{transform_indices = @transform_0, window_bounds = array<i64: 512, 32>}, {pipeline_mode = #tpu.pipeline_mode<synchronous>, transform_indices = @transform_1, window_bounds = array<i64: 32, 64>}, {pipeline_mode = #tpu.pipeline_mode<synchronous>, transform_indices = @transform_2, window_bounds = array<i64: 1, 64>}, {pipeline_mode = #tpu.pipeline_mode<synchronous>, transform_indices = @transform_3, window_bounds = array<i64: 64, 16>}, {pipeline_mode = #tpu.pipeline_mode<synchronous>, transform_indices = @transform_4, window_bounds = array<i64: 1, 16>}, {transform_indices = @transform_5, window_bounds = array<i64: 512, 16>}]} {
    %c0 = arith.constant 0 : index
    %c0_0 = arith.constant 0 : index
    %0 = vector.load %arg1[%c0, %c0_0] : memref<512x32xf32, #tpu.memory_space<vmem>>, vector<512x32xf32>
    %c0_1 = arith.constant 0 : index
    %c0_2 = arith.constant 0 : index
    %1 = vector.load %arg2[%c0_1, %c0_2] : memref<32x64xf32, #tpu.memory_space<vmem>>, vector<32x64xf32>
    %cst = arith.constant dense<0.000000e+00> : vector<512x64xf32>
    %2 = tpu.matmul %0, %1, %cst {dimension_numbers = #tpu.dot_dimension_numbers<[1], [0], [0], [1], [0, 0, 1, 1], [], []>} : vector<512x32xf32>, vector<32x64xf32>, vector<512x64xf32> -> vector<512x64xf32>
    %c0_3 = arith.constant 0 : index
    %c0_4 = arith.constant 0 : index
    %3 = vector.load %arg3[%c0_3, %c0_4] : memref<1x64xf32, #tpu.memory_space<vmem>>, vector<1x64xf32>
    %4 = vector.broadcast %3 : vector<1x64xf32> to vector<512x64xf32>
    %5 = arith.addf %2, %4 : vector<512x64xf32>
    %cst_5 = arith.constant 0.000000e+00 : f32
    %6 = vector.broadcast %cst_5 : f32 to vector<512x64xf32>
    %7 = arith.maximumf %5, %6 : vector<512x64xf32>
    %c0_6 = arith.constant 0 : index
    %c0_7 = arith.constant 0 : index
    %8 = vector.load %arg4[%c0_6, %c0_7] : memref<64x16xf32, #tpu.memory_space<vmem>>, vector<64x16xf32>
    %cst_8 = arith.constant dense<0.000000e+00> : vector<512x16xf32>
    %9 = tpu.matmul %7, %8, %cst_8 {dimension_numbers = #tpu.dot_dimension_numbers<[1], [0], [0], [1], [0, 0, 1, 1], [], []>} : vector<512x64xf32>, vector<64x16xf32>, vector<512x16xf32> -> vector<512x16xf32>
    %c0_9 = arith.constant 0 : index
    %c0_10 = arith.constant 0 : index
    %10 = vector.load %arg5[%c0_9, %c0_10] : memref<1x16xf32, #tpu.memory_space<vmem>>, vector<1x16xf32>
    %11 = vector.broadcast %10 : vector<1x16xf32> to vector<512x16xf32>
    %12 = arith.addf %9, %11 : vector<512x16xf32>
    %cst_11 = arith.constant dense<0xFF800000> : vector<512xf32>
    %13 = vector.multi_reduction <maximumf>, %12, %cst_11 [1] : vector<512x16xf32> to vector<512xf32>
    %14 = vector.shape_cast %13 : vector<512xf32> to vector<512x1xf32>
    %15 = vector.broadcast %14 : vector<512x1xf32> to vector<512x16xf32>
    %16 = arith.subf %12, %15 : vector<512x16xf32>
    %17 = math.exp %16 : vector<512x16xf32>
    %cst_12 = arith.constant dense<0.000000e+00> : vector<512xf32>
    %18 = vector.multi_reduction <add>, %17, %cst_12 [1] : vector<512x16xf32> to vector<512xf32>
    %19 = vector.shape_cast %18 : vector<512xf32> to vector<512x1xf32>
    %20 = vector.broadcast %19 : vector<512x1xf32> to vector<512x16xf32>
    %21 = arith.divf %17, %20 : vector<512x16xf32>
    %c0_13 = arith.constant 0 : index
    %c0_14 = arith.constant 0 : index
    %22 = vector.load %arg6[%c0_13, %c0_14] : memref<512x16xf32, #tpu.memory_space<vmem>>, vector<512x16xf32>
    tpu.vector_store %arg6[%c0_13, %c0_14], %21 {strides = array<i32>} : memref<512x16xf32, #tpu.memory_space<vmem>>, vector<512x16xf32>,
    return
  }
  func.func @transform_0(%arg0: i32) -> (i32, i32) {
    %c0_i32 = arith.constant 0 : i32
    %c0_i32_0 = arith.constant 0 : i32
    return %arg0, %c0_i32 : i32, i32
  }
  func.func @transform_1(%arg0: i32) -> (i32, i32) {
    %c0_i32 = arith.constant 0 : i32
    %c0_i32_0 = arith.constant 0 : i32
    %c0_i32_1 = arith.constant 0 : i32
    return %c0_i32, %c0_i32_0 : i32, i32
  }
  func.func @transform_2(%arg0: i32) -> (i32, i32) {
    %c0_i32 = arith.constant 0 : i32
    %c0_i32_0 = arith.constant 0 : i32
    %c0_i32_1 = arith.constant 0 : i32
    return %c0_i32, %c0_i32_0 : i32, i32
  }
  func.func @transform_3(%arg0: i32) -> (i32, i32) {
    %c0_i32 = arith.constant 0 : i32
    %c0_i32_0 = arith.constant 0 : i32
    %c0_i32_1 = arith.constant 0 : i32
    return %c0_i32, %c0_i32_0 : i32, i32
  }
  func.func @transform_4(%arg0: i32) -> (i32, i32) {
    %c0_i32 = arith.constant 0 : i32
    %c0_i32_0 = arith.constant 0 : i32
    %c0_i32_1 = arith.constant 0 : i32
    return %c0_i32, %c0_i32_0 : i32, i32
  }
  func.func @transform_5(%arg0: i32) -> (i32, i32) {
    %c0_i32 = arith.constant 0 : i32
    %c0_i32_0 = arith.constant 0 : i32
    return %arg0, %c0_i32 : i32, i32
  }
}

</mosaic_0001>

<llo_original>
// kernel: tpu_custom_call.1
$region0: #{tpu_custom_call.1}
  #allocation0 [shape = 'u32[]', space=smem, size = 0x4, offset = 0x4, fixed_abs, tag = 'smem constant byte address 0x4 - core index']
  #allocation1 [shape = 'u32[144,128]{1,0:T(1,128)}', space=vmem, size = 0x12000, scoped, tag = 'internal scratch']
  %s0 = inlined_call_operand.vmem [shape: f32[512,32], index: 0, kind: input, shape index: {}]
  %s1 = inlined_call_operand.vmem [shape: f32[32,64], index: 1, kind: input, shape index: {}]
  %s2 = inlined_call_operand.vmem [shape: f32[1,64], index: 2, kind: input, shape index: {}]
  %s3 = inlined_call_operand.vmem [shape: f32[64,16], index: 3, kind: input, shape index: {}]
  %s4 = inlined_call_operand.vmem [shape: f32[1,16], index: 4, kind: input, shape index: {}]
  %s5 = inlined_call_operand.vmem [shape: f32[512,16], index: 5, kind: output, shape index: {}]
  %s6 = sld [smem:[#allocation0]]
  $region30: #{tpu_custom_call.1} parent=0
    _
  %s8 = ssub.s32 1, %s6
  %s9 = scalar_select 0, %s8, %s6
  // Predicated region
  $region2: #{tpu_custom_call.1} parent=0 // pred_check
    _
  $region3: #{tpu_custom_call.1} parent=0 // pred_check_branch
    %11 = sbr.rel (0) target = $region5
  $region4: #{tpu_custom_call.1} parent=0 // pred_region
    _
  $region5: #{tpu_custom_call.1} parent=0 // pred_fallthru
    _
  // Predicated region
  $region6: #{tpu_custom_call.1} parent=0 // pred_check
    _
  $region7: #{tpu_custom_call.1} parent=0 // pred_check_branch
    %13 = sbr.rel (0) target = $region9
  $region8: #{tpu_custom_call.1} parent=0 // pred_region
    _
  $region9: #{tpu_custom_call.1} parent=0 // pred_fallthru
    _
  // Predicated region
  $region10: #{tpu_custom_call.1} parent=0 // pred_check
    _
  $region11: #{tpu_custom_call.1} parent=0 // pred_check_branch
    %15 = sbr.rel (0) target = $region13
  $region12: #{tpu_custom_call.1} parent=0 // pred_region
    _
  $region13: #{tpu_custom_call.1} parent=0 // pred_fallthru
    _
  // Predicated region
  $region14: #{tpu_custom_call.1} parent=0 // pred_check
    _
  $region15: #{tpu_custom_call.1} parent=0 // pred_check_branch
    %17 = sbr.rel (0) target = $region17
  $region16: #{tpu_custom_call.1} parent=0 // pred_region
    _
  $region17: #{tpu_custom_call.1} parent=0 // pred_fallthru
    _
  // Predicated region
  $region18: #{tpu_custom_call.1} parent=0 // pred_check
    _
  $region19: #{tpu_custom_call.1} parent=0 // pred_check_branch
    %19 = sbr.rel (0) target = $region21
  $region20: #{tpu_custom_call.1} parent=0 // pred_region
    _
  $region21: #{tpu_custom_call.1} parent=0 // pred_fallthru
    _
  %v20 = vld [vmem:[%s0] sm:$0xff]
  %v21 = vld [vmem:[%s0 + $0x8] sm:$0xff]
  %v22 = vld [vmem:[%s0 + $0x10] sm:$0xff]
  %v23 = vld [vmem:[%s0 + $0x18] sm:$0xff]
  %v24 = vld [vmem:[%s0 + $0x20] sm:$0xff]
  %v25 = vld [vmem:[%s0 + $0x28] sm:$0xff]
  %v26 = vld [vmem:[%s0 + $0x30] sm:$0xff]
  %v27 = vld [vmem:[%s0 + $0x38] sm:$0xff]
  %v28 = vld [vmem:[%s0 + $0x40] sm:$0xff]
  %v29 = vld [vmem:[%s0 + $0x48] sm:$0xff]
  %v30 = vld [vmem:[%s0 + $0x50] sm:$0xff]
  %v31 = vld [vmem:[%s0 + $0x58] sm:$0xff]
  %v32 = vld [vmem:[%s0 + $0x60] sm:$0xff]
  %v33 = vld [vmem:[%s0 + $0x68] sm:$0xff]
  %v34 = vld [vmem:[%s0 + $0x70] sm:$0xff]
  %v35 = vld [vmem:[%s0 + $0x78] sm:$0xff]
  %v36 = vld [vmem:[%s0 + $0x80] sm:$0xff]
  %v37 = vld [vmem:[%s0 + $0x88] sm:$0xff]
  %v38 = vld [vmem:[%s0 + $0x90] sm:$0xff]
  %v39 = vld [vmem:[%s0 + $0x98] sm:$0xff]
  %v40 = vld [vmem:[%s0 + $0xa0] sm:$0xff]
  %v41 = vld [vmem:[%s0 + $0xa8] sm:$0xff]
  %v42 = vld [vmem:[%s0 + $0xb0] sm:$0xff]
  %v43 = vld [vmem:[%s0 + $0xb8] sm:$0xff]
  %v44 = vld [vmem:[%s0 + $0xc0] sm:$0xff]
  %v45 = vld [vmem:[%s0 + $0xc8] sm:$0xff]
  %v46 = vld [vmem:[%s0 + $0xd0] sm:$0xff]
  %v47 = vld [vmem:[%s0 + $0xd8] sm:$0xff]
  %v48 = vld [vmem:[%s0 + $0xe0] sm:$0xff]
  %v49 = vld [vmem:[%s0 + $0xe8] sm:$0xff]
  %v50 = vld [vmem:[%s0 + $0xf0] sm:$0xff]
  %v51 = vld [vmem:[%s0 + $0xf8] sm:$0xff]
  %v52 = vld [vmem:[%s0 + $0x100] sm:$0xff]
  %v53 = vld [vmem:[%s0 + $0x108] sm:$0xff]
  %v54 = vld [vmem:[%s0 + $0x110] sm:$0xff]
  %v55 = vld [vmem:[%s0 + $0x118] sm:$0xff]
  %v56 = vld [vmem:[%s0 + $0x120] sm:$0xff]
  %v57 = vld [vmem:[%s0 + $0x128] sm:$0xff]
  %v58 = vld [vmem:[%s0 + $0x130] sm:$0xff]
  %v59 = vld [vmem:[%s0 + $0x138] sm:$0xff]
  %v60 = vld [vmem:[%s0 + $0x140] sm:$0xff]
  %v61 = vld [vmem:[%s0 + $0x148] sm:$0xff]
  %v62 = vld [vmem:[%s0 + $0x150] sm:$0xff]
  %v63 = vld [vmem:[%s0 + $0x158] sm:$0xff]
  %v64 = vld [vmem:[%s0 + $0x160] sm:$0xff]
  %v65 = vld [vmem:[%s0 + $0x168] sm:$0xff]
  %v66 = vld [vmem:[%s0 + $0x170] sm:$0xff]
  %v67 = vld [vmem:[%s0 + $0x178] sm:$0xff]
  %v68 = vld [vmem:[%s0 + $0x180] sm:$0xff]
  %v69 = vld [vmem:[%s0 + $0x188] sm:$0xff]
  %v70 = vld [vmem:[%s0 + $0x190] sm:$0xff]
  %v71 = vld [vmem:[%s0 + $0x198] sm:$0xff]
  %v72 = vld [vmem:[%s0 + $0x1a0] sm:$0xff]
  %v73 = vld [vmem:[%s0 + $0x1a8] sm:$0xff]
  %v74 = vld [vmem:[%s0 + $0x1b0] sm:$0xff]
  %v75 = vld [vmem:[%s0 + $0x1b8] sm:$0xff]
  %v76 = vld [vmem:[%s0 + $0x1c0] sm:$0xff]
  %v77 = vld [vmem:[%s0 + $0x1c8] sm:$0xff]
  %v78 = vld [vmem:[%s0 + $0x1d0] sm:$0xff]
  %v79 = vld [vmem:[%s0 + $0x1d8] sm:$0xff]
  %v80 = vld [vmem:[%s0 + $0x1e0] sm:$0xff]
  %v81 = vld [vmem:[%s0 + $0x1e8] sm:$0xff]
  %v82 = vld [vmem:[%s0 + $0x1f0] sm:$0xff]
  %v83 = vld [vmem:[%s0 + $0x1f8] sm:$0xff]
  %v84 = vld [vmem:[%s1] sm:$0xff]
  %v85 = vld [vmem:[%s1 + $0x8] sm:$0xff]
  %v86 = vld [vmem:[%s1 + $0x10] sm:$0xff]
  %v87 = vld [vmem:[%s1 + $0x18] sm:$0xff]
  %v88 = vld [vmem:[%s2] sm:$0x1]
  %v90 = vlaneseq
  %v91 = vshrl.u32 %v90, 7
  %v92 = vsub.s32 0, %v91
  %v93 = vrot.slane %v88, %v92
  %vm95 = vcmask 261120
  %v97 = vsel %vm95, %v20, 0
  %v100 = vsel %vm95, %v21, 0
  %v103 = vsel %vm95, %v22, 0
  %v106 = vsel %vm95, %v23, 0
  %v109 = vsel %vm95, %v24, 0
  %v112 = vsel %vm95, %v25, 0
  %v115 = vsel %vm95, %v26, 0
  %v118 = vsel %vm95, %v27, 0
  %v121 = vsel %vm95, %v28, 0
  %v124 = vsel %vm95, %v29, 0
  %v127 = vsel %vm95, %v30, 0
  %v130 = vsel %vm95, %v31, 0
  %v133 = vsel %vm95, %v32, 0
  %v136 = vsel %vm95, %v33, 0
  %v139 = vsel %vm95, %v34, 0
  %v142 = vsel %vm95, %v35, 0
  %v145 = vsel %vm95, %v36, 0
  %v148 = vsel %vm95, %v37, 0
  %v151 = vsel %vm95, %v38, 0
  %v154 = vsel %vm95, %v39, 0
  %v157 = vsel %vm95, %v40, 0
  %v160 = vsel %vm95, %v41, 0
  %v163 = vsel %vm95, %v42, 0
  %v166 = vsel %vm95, %v43, 0
  %v169 = vsel %vm95, %v44, 0
  %v172 = vsel %vm95, %v45, 0
  %v175 = vsel %vm95, %v46, 0
  %v178 = vsel %vm95, %v47, 0
  %v181 = vsel %vm95, %v48, 0
  %v184 = vsel %vm95, %v49, 0
  %v187 = vsel %vm95, %v50, 0
  %v190 = vsel %vm95, %v51, 0
  %v193 = vsel %vm95, %v52, 0
  %v196 = vsel %vm95, %v53, 0
  %v199 = vsel %vm95, %v54, 0
  %v202 = vsel %vm95, %v55, 0
  %v205 = vsel %vm95, %v56, 0
  %v208 = vsel %vm95, %v57, 0
  %v211 = vsel %vm95, %v58, 0
  %v214 = vsel %vm95, %v59, 0
  %v217 = vsel %vm95, %v60, 0
  %v220 = vsel %vm95, %v61, 0
  %v223 = vsel %vm95, %v62, 0
  %v226 = vsel %vm95, %v63, 0
  %v229 = vsel %vm95, %v64, 0
  %v232 = vsel %vm95, %v65, 0
  %v235 = vsel %vm95, %v66, 0
  %v238 = vsel %vm95, %v67, 0
  %v241 = vsel %vm95, %v68, 0
  %v244 = vsel %vm95, %v69, 0
  %v247 = vsel %vm95, %v70, 0
  %v250 = vsel %vm95, %v71, 0
  %v253 = vsel %vm95, %v72, 0
  %v256 = vsel %vm95, %v73, 0
  %v259 = vsel %vm95, %v74, 0
  %v262 = vsel %vm95, %v75, 0
  %v265 = vsel %vm95, %v76, 0
  %v268 = vsel %vm95, %v77, 0
  %v271 = vsel %vm95, %v78, 0
  %v274 = vsel %vm95, %v79, 0
  %v277 = vsel %vm95, %v80, 0
  %v280 = vsel %vm95, %v81, 0
  %v283 = vsel %vm95, %v82, 0
  %v286 = vsel %vm95, %v83, 0
  %288 = vmatprep.subr.mxu0 0.0
  %289 = vmatpush1.msra.mxu0 %v84
  %290 = vmatprep.subr.mxu0 0.0
  %291 = vmatpush1.msra.mxu0 %v85
  %292 = vmatprep.subr.mxu0 0.0
  %293 = vmatpush1.msra.mxu0 %v86
  %294 = vmatprep.subr.mxu0 0.0
  %295 = vmatpush1.msra.mxu0 %v87
  %296 = vmatprep.subr.mxu0 0.0
  %297 = vmatpush1.msra.mxu0 0.0
  %298 = vmatprep.subr.mxu0 0.0
  %299 = vmatpush1.msra.mxu0 0.0
  %300 = vmatprep.subr.mxu0 0.0
  %301 = vmatpush1.msra.mxu0 0.0
  %302 = vmatprep.subr.mxu0 0.0
  %303 = vmatpush1.msra.mxu0 0.0
  %304 = vmatprep.subr.mxu0 0.0
  %305 = vmatpush1.msra.mxu0 0.0
  %306 = vmatprep.subr.mxu0 0.0
  %307 = vmatpush1.msra.mxu0 0.0
  %308 = vmatprep.subr.mxu0 0.0
  %309 = vmatpush1.msra.mxu0 0.0
  %310 = vmatprep.subr.mxu0 0.0
  %311 = vmatpush1.msra.mxu0 0.0
  %312 = vmatprep.subr.mxu0 0.0
  %313 = vmatpush1.msra.mxu0 0.0
  %314 = vmatprep.subr.mxu0 0.0
  %315 = vmatpush1.msra.mxu0 0.0
  %316 = vmatprep.subr.mxu0 0.0
  %317 = vmatpush1.msra.mxu0 0.0
  %318 = vmatprep.subr.mxu0 0.0
  %319 = vmatpush1.msra.mxu0 0.0
  %320 = vmatprep.subr.mxu0 0.0
  %321 = vmatpush1.msra.mxu0 0.0
  %322 = vmatprep.subr.mxu0 0.0
  %323 = vmatpush1.msra.mxu0 0.0
  %324 = vmatprep.subr.mxu0 0.0
  %325 = vmatpush1.msra.mxu0 0.0
  %326 = vmatprep.subr.mxu0 0.0
  %327 = vmatpush1.msra.mxu0 0.0
  %328 = vmatprep.subr.mxu0 0.0
  %329 = vmatpush1.msra.mxu0 0.0
  %330 = vmatprep.subr.mxu0 0.0
  %331 = vmatpush1.msra.mxu0 0.0
  %332 = vmatprep.subr.mxu0 0.0
  %333 = vmatpush1.msra.mxu0 0.0
  %334 = vmatprep.subr.mxu0 0.0
  %335 = vmatpush1.msra.mxu0 0.0
  %336 = vmatprep.subr.mxu0 0.0
  %337 = vmatpush1.msra.mxu0 0.0
  %338 = vmatprep.subr.mxu0 0.0
  %339 = vmatpush1.msra.mxu0 0.0
  %340 = vmatprep.subr.mxu0 0.0
  %341 = vmatpush1.msra.mxu0 0.0
  %342 = vmatprep.subr.mxu0 0.0
  %343 = vmatpush1.msra.mxu0 0.0
  %344 = vmatprep.subr.mxu0 0.0
  %345 = vmatpush1.msra.mxu0 0.0
  %346 = vmatprep.subr.mxu0 0.0
  %347 = vmatpush1.msra.mxu0 0.0
  %348 = vmatprep.subr.mxu0 0.0
  %349 = vmatpush1.msra.mxu0 0.0
  %350 = vmatprep.subr.mxu0 0.0
  %351 = vmatpush1.msra.mxu0 0.0
  %352 = vmatprep.mubr.f32.mxu0 0.0
  %353 = vmatmul.mubr.f32.gmra.mrb[0].mxu0 %v97
  %v354 = vpop.f32.mrb[0].mxu0
  %v355 = vadd.f32 %v93, %v354
  %v356 = vpop.f32.mrb[0].mxu0
  %357 = vmatprep.mubr.f32.mxu0 0.0
  %358 = vmatmul.mubr.f32.gmra.mrb[0].mxu0 %v100
  %v359 = vpop.f32.mrb[0].mxu0
  %v360 = vadd.f32 %v93, %v359
  %v361 = vpop.f32.mrb[0].mxu0
  %362 = vmatprep.mubr.f32.mxu0 0.0
  %363 = vmatmul.mubr.f32.gmra.mrb[0].mxu0 %v103
  %v364 = vpop.f32.mrb[0].mxu0
  %v365 = vadd.f32 %v93, %v364
  %v366 = vpop.f32.mrb[0].mxu0
  %367 = vmatprep.mubr.f32.mxu0 0.0
  %368 = vmatmul.mubr.f32.gmra.mrb[0].mxu0 %v106
  %v369 = vpop.f32.mrb[0].mxu0
  %v370 = vadd.f32 %v93, %v369
  %v371 = vpop.f32.mrb[0].mxu0
  %372 = vmatprep.mubr.f32.mxu0 0.0
  %373 = vmatmul.mubr.f32.gmra.mrb[0].mxu0 %v109
  %v374 = vpop.f32.mrb[0].mxu0
  %v375 = vadd.f32 %v93, %v374
  %v376 = vpop.f32.mrb[0].mxu0
  %377 = vmatprep.mubr.f32.mxu0 0.0
  %378 = vmatmul.mubr.f32.gmra.mrb[0].mxu0 %v112
  %v379 = vpop.f32.mrb[0].mxu0
  %v380 = vadd.f32 %v93, %v379
  %v381 = vpop.f32.mrb[0].mxu0
  %382 = vmatprep.mubr.f32.mxu0 0.0
  %383 = vmatmul.mubr.f32.gmra.mrb[0].mxu0 %v115
  %v384 = vpop.f32.mrb[0].mxu0
  %v385 = vadd.f32 %v93, %v384
  %v386 = vpop.f32.mrb[0].mxu0
  %387 = vmatprep.mubr.f32.mxu0 0.0
  %388 = vmatmul.mubr.f32.gmra.mrb[0].mxu0 %v118
  %v389 = vpop.f32.mrb[0].mxu0
  %v390 = vadd.f32 %v93, %v389
  %v391 = vpop.f32.mrb[0].mxu0
  %392 = vmatprep.mubr.f32.mxu0 0.0
  %393 = vmatmul.mubr.f32.gmra.mrb[0].mxu0 %v121
  %v394 = vpop.f32.mrb[0].mxu0
  %v395 = vadd.f32 %v93, %v394
  %v396 = vpop.f32.mrb[0].mxu0
  %397 = vmatprep.mubr.f32.mxu0 0.0
  %398 = vmatmul.mubr.f32.gmra.mrb[0].mxu0 %v124
  %v399 = vpop.f32.mrb[0].mxu0
  %v400 = vadd.f32 %v93, %v399
  %v401 = vpop.f32.mrb[0].mxu0
  %402 = vmatprep.mubr.f32.mxu0 0.0
  %403 = vmatmul.mubr.f32.gmra.mrb[0].mxu0 %v127
  %v404 = vpop.f32.mrb[0].mxu0
  %v405 = vadd.f32 %v93, %v404
  %v406 = vpop.f32.mrb[0].mxu0
  %407 = vmatprep.mubr.f32.mxu0 0.0
  %408 = vmatmul.mubr.f32.gmra.mrb[0].mxu0 %v130
  %v409 = vpop.f32.mrb[0].mxu0
  %v410 = vadd.f32 %v93, %v409
  %v411 = vpop.f32.mrb[0].mxu0
  %412 = vmatprep.mubr.f32.mxu0 0.0
  %413 = vmatmul.mubr.f32.gmra.mrb[0].mxu0 %v133
  %v414 = vpop.f32.mrb[0].mxu0
  %v415 = vadd.f32 %v93, %v414
  %v416 = vpop.f32.mrb[0].mxu0
  %417 = vmatprep.mubr.f32.mxu0 0.0
  %418 = vmatmul.mubr.f32.gmra.mrb[0].mxu0 %v136
  %v419 = vpop.f32.mrb[0].mxu0
  %v420 = vadd.f32 %v93, %v419
  %v421 = vpop.f32.mrb[0].mxu0
  %422 = vmatprep.mubr.f32.mxu0 0.0
  %423 = vmatmul.mubr.f32.gmra.mrb[0].mxu0 %v139
  %v424 = vpop.f32.mrb[0].mxu0
  %v425 = vadd.f32 %v93, %v424
  %v426 = vpop.f32.mrb[0].mxu0
  %427 = vmatprep.mubr.f32.mxu0 0.0
  %428 = vmatmul.mubr.f32.gmra.mrb[0].mxu0 %v142
  %v429 = vpop.f32.mrb[0].mxu0
  %v430 = vadd.f32 %v93, %v429
  %v431 = vpop.f32.mrb[0].mxu0
  %432 = vmatprep.mubr.f32.mxu0 0.0
  %433 = vmatmul.mubr.f32.gmra.mrb[0].mxu0 %v145
  %v434 = vpop.f32.mrb[0].mxu0
  %v435 = vadd.f32 %v93, %v434
  %v436 = vpop.f32.mrb[0].mxu0
  %437 = vmatprep.mubr.f32.mxu0 0.0
  %438 = vmatmul.mubr.f32.gmra.mrb[0].mxu0 %v148
  %v439 = vpop.f32.mrb[0].mxu0
  %v440 = vadd.f32 %v93, %v439
  %v441 = vpop.f32.mrb[0].mxu0
  %442 = vmatprep.mubr.f32.mxu0 0.0
  %443 = vmatmul.mubr.f32.gmra.mrb[0].mxu0 %v151
  %v444 = vpop.f32.mrb[0].mxu0
  %v445 = vadd.f32 %v93, %v444
  %v446 = vpop.f32.mrb[0].mxu0
  %447 = vmatprep.mubr.f32.mxu0 0.0
  %448 = vmatmul.mubr.f32.gmra.mrb[0].mxu0 %v154
  %v449 = vpop.f32.mrb[0].mxu0
  %v450 = vadd.f32 %v93, %v449
  %v451 = vpop.f32.mrb[0].mxu0
  %452 = vmatprep.mubr.f32.mxu0 0.0
  %453 = vmatmul.mubr.f32.gmra.mrb[0].mxu0 %v157
  %v454 = vpop.f32.mrb[0].mxu0
  %v455 = vadd.f32 %v93, %v454
  %v456 = vpop.f32.mrb[0].mxu0
  %457 = vmatprep.mubr.f32.mxu0 0.0
  %458 = vmatmul.mubr.f32.gmra.mrb[0].mxu0 %v160
  %v459 = vpop.f32.mrb[0].mxu0
  %v460 = vadd.f32 %v93, %v459
  %v461 = vpop.f32.mrb[0].mxu0
  %462 = vmatprep.mubr.f32.mxu0 0.0
  %463 = vmatmul.mubr.f32.gmra.mrb[0].mxu0 %v163
  %v464 = vpop.f32.mrb[0].mxu0
  %v465 = vadd.f32 %v93, %v464
  %v466 = vpop.f32.mrb[0].mxu0
  %467 = vmatprep.mubr.f32.mxu0 0.0
  %468 = vmatmul.mubr.f32.gmra.mrb[0].mxu0 %v166
  %v469 = vpop.f32.mrb[0].mxu0
  %v470 = vadd.f32 %v93, %v469
  %v471 = vpop.f32.mrb[0].mxu0
  %472 = vmatprep.mubr.f32.mxu0 0.0
  %473 = vmatmul.mubr.f32.gmra.mrb[0].mxu0 %v169
  %v474 = vpop.f32.mrb[0].mxu0
  %v475 = vadd.f32 %v93, %v474
  %v476 = vpop.f32.mrb[0].mxu0
  %477 = vmatprep.mubr.f32.mxu0 0.0
  %478 = vmatmul.mubr.f32.gmra.mrb[0].mxu0 %v172
  %v479 = vpop.f32.mrb[0].mxu0
  %v480 = vadd.f32 %v93, %v479
  %v481 = vpop.f32.mrb[0].mxu0
  %482 = vmatprep.mubr.f32.mxu0 0.0
  %483 = vmatmul.mubr.f32.gmra.mrb[0].mxu0 %v175
  %v484 = vpop.f32.mrb[0].mxu0
  %v485 = vadd.f32 %v93, %v484
  %v486 = vpop.f32.mrb[0].mxu0
  %487 = vmatprep.mubr.f32.mxu0 0.0
  %488 = vmatmul.mubr.f32.gmra.mrb[0].mxu0 %v178
  %v489 = vpop.f32.mrb[0].mxu0
  %v490 = vadd.f32 %v93, %v489
  %v491 = vpop.f32.mrb[0].mxu0
  %492 = vmatprep.mubr.f32.mxu0 0.0
  %493 = vmatmul.mubr.f32.gmra.mrb[0].mxu0 %v181
  %v494 = vpop.f32.mrb[0].mxu0
  %v495 = vadd.f32 %v93, %v494
  %v496 = vpop.f32.mrb[0].mxu0
  %497 = vmatprep.mubr.f32.mxu0 0.0
  %498 = vmatmul.mubr.f32.gmra.mrb[0].mxu0 %v184
  %v499 = vpop.f32.mrb[0].mxu0
  %v500 = vadd.f32 %v93, %v499
  %v501 = vpop.f32.mrb[0].mxu0
  %502 = vmatprep.mubr.f32.mxu0 0.0
  %503 = vmatmul.mubr.f32.gmra.mrb[0].mxu0 %v187
  %v504 = vpop.f32.mrb[0].mxu0
  %v505 = vadd.f32 %v93, %v504
  %v506 = vpop.f32.mrb[0].mxu0
  %507 = vmatprep.mubr.f32.mxu0 0.0
  %508 = vmatmul.mubr.f32.gmra.mrb[0].mxu0 %v190
  %v509 = vpop.f32.mrb[0].mxu0
  %v510 = vadd.f32 %v93, %v509
  %v511 = vpop.f32.mrb[0].mxu0
  %512 = vmatprep.mubr.f32.mxu0 0.0
  %513 = vmatmul.mubr.f32.gmra.mrb[0].mxu0 %v193
  %v514 = vpop.f32.mrb[0].mxu0
  %v515 = vadd.f32 %v93, %v514
  %v516 = vpop.f32.mrb[0].mxu0
  %517 = vmatprep.mubr.f32.mxu0 0.0
  %518 = vmatmul.mubr.f32.gmra.mrb[0].mxu0 %v196
  %v519 = vpop.f32.mrb[0].mxu0
  %v520 = vadd.f32 %v93, %v519
  %v521 = vpop.f32.mrb[0].mxu0
  %522 = vmatprep.mubr.f32.mxu0 0.0
  %523 = vmatmul.mubr.f32.gmra.mrb[0].mxu0 %v199
  %v524 = vpop.f32.mrb[0].mxu0
  %v525 = vadd.f32 %v93, %v524
  %v526 = vpop.f32.mrb[0].mxu0
  %527 = vmatprep.mubr.f32.mxu0 0.0
  %528 = vmatmul.mubr.f32.gmra.mrb[0].mxu0 %v202
  %v529 = vpop.f32.mrb[0].mxu0
  %v530 = vadd.f32 %v93, %v529
  %v531 = vpop.f32.mrb[0].mxu0
  %532 = vmatprep.mubr.f32.mxu0 0.0
  %533 = vmatmul.mubr.f32.gmra.mrb[0].mxu0 %v205
  %v534 = vpop.f32.mrb[0].mxu0
  %v535 = vadd.f32 %v93, %v534
  %v536 = vpop.f32.mrb[0].mxu0
  %537 = vmatprep.mubr.f32.mxu0 0.0
  %538 = vmatmul.mubr.f32.gmra.mrb[0].mxu0 %v208
  %v539 = vpop.f32.mrb[0].mxu0
  %v540 = vadd.f32 %v93, %v539
  %v541 = vpop.f32.mrb[0].mxu0
  %542 = vmatprep.mubr.f32.mxu0 0.0
  %543 = vmatmul.mubr.f32.gmra.mrb[0].mxu0 %v211
  %v544 = vpop.f32.mrb[0].mxu0
  %v545 = vadd.f32 %v93, %v544
  %v546 = vpop.f32.mrb[0].mxu0
  %547 = vmatprep.mubr.f32.mxu0 0.0
  %548 = vmatmul.mubr.f32.gmra.mrb[0].mxu0 %v214
  %v549 = vpop.f32.mrb[0].mxu0
  %v550 = vadd.f32 %v93, %v549
  %v551 = vpop.f32.mrb[0].mxu0
  %552 = vmatprep.mubr.f32.mxu0 0.0
  %553 = vmatmul.mubr.f32.gmra.mrb[0].mxu0 %v217
  %v554 = vpop.f32.mrb[0].mxu0
  %v555 = vadd.f32 %v93, %v554
  %v556 = vpop.f32.mrb[0].mxu0
  %557 = vmatprep.mubr.f32.mxu0 0.0
  %558 = vmatmul.mubr.f32.gmra.mrb[0].mxu0 %v220
  %v559 = vpop.f32.mrb[0].mxu0
  %v560 = vadd.f32 %v93, %v559
  %v561 = vpop.f32.mrb[0].mxu0
  %562 = vmatprep.mubr.f32.mxu0 0.0
  %563 = vmatmul.mubr.f32.gmra.mrb[0].mxu0 %v223
  %v564 = vpop.f32.mrb[0].mxu0
  %v565 = vadd.f32 %v93, %v564
  %v566 = vpop.f32.mrb[0].mxu0
  %567 = vmatprep.mubr.f32.mxu0 0.0
  %568 = vmatmul.mubr.f32.gmra.mrb[0].mxu0 %v226
  %v569 = vpop.f32.mrb[0].mxu0
  %v570 = vadd.f32 %v93, %v569
  %v571 = vpop.f32.mrb[0].mxu0
  %572 = vmatprep.mubr.f32.mxu0 0.0
  %573 = vmatmul.mubr.f32.gmra.mrb[0].mxu0 %v229
  %v574 = vpop.f32.mrb[0].mxu0
  %v575 = vadd.f32 %v93, %v574
  %v576 = vpop.f32.mrb[0].mxu0
  %577 = vmatprep.mubr.f32.mxu0 0.0
  %578 = vmatmul.mubr.f32.gmra.mrb[0].mxu0 %v232
  %v579 = vpop.f32.mrb[0].mxu0
  %v580 = vadd.f32 %v93, %v579
  %v581 = vpop.f32.mrb[0].mxu0
  %582 = vmatprep.mubr.f32.mxu0 0.0
  %583 = vmatmul.mubr.f32.gmra.mrb[0].mxu0 %v235
  %v584 = vpop.f32.mrb[0].mxu0
  %v585 = vadd.f32 %v93, %v584
  %v586 = vpop.f32.mrb[0].mxu0
  %587 = vmatprep.mubr.f32.mxu0 0.0
  %588 = vmatmul.mubr.f32.gmra.mrb[0].mxu0 %v238
  %v589 = vpop.f32.mrb[0].mxu0
  %v590 = vadd.f32 %v93, %v589
  %v591 = vpop.f32.mrb[0].mxu0
  %592 = vmatprep.mubr.f32.mxu0 0.0
  %593 = vmatmul.mubr.f32.gmra.mrb[0].mxu0 %v241
  %v594 = vpop.f32.mrb[0].mxu0
  %v595 = vadd.f32 %v93, %v594
  %v596 = vpop.f32.mrb[0].mxu0
  %597 = vmatprep.mubr.f32.mxu0 0.0
  %598 = vmatmul.mubr.f32.gmra.mrb[0].mxu0 %v244
  %v599 = vpop.f32.mrb[0].mxu0
  %v600 = vadd.f32 %v93, %v599
  %v601 = vpop.f32.mrb[0].mxu0
  %602 = vmatprep.mubr.f32.mxu0 0.0
  %603 = vmatmul.mubr.f32.gmra.mrb[0].mxu0 %v247
  %v604 = vpop.f32.mrb[0].mxu0
  %v605 = vadd.f32 %v93, %v604
  %v606 = vpop.f32.mrb[0].mxu0
  %607 = vmatprep.mubr.f32.mxu0 0.0
  %608 = vmatmul.mubr.f32.gmra.mrb[0].mxu0 %v250
  %v609 = vpop.f32.mrb[0].mxu0
  %v610 = vadd.f32 %v93, %v609
  %v611 = vpop.f32.mrb[0].mxu0
  %612 = vmatprep.mubr.f32.mxu0 0.0
  %613 = vmatmul.mubr.f32.gmra.mrb[0].mxu0 %v253
  %v614 = vpop.f32.mrb[0].mxu0
  %v615 = vadd.f32 %v93, %v614
  %v616 = vpop.f32.mrb[0].mxu0
  %617 = vmatprep.mubr.f32.mxu0 0.0
  %618 = vmatmul.mubr.f32.gmra.mrb[0].mxu0 %v256
  %v619 = vpop.f32.mrb[0].mxu0
  %v620 = vadd.f32 %v93, %v619
  %v621 = vpop.f32.mrb[0].mxu0
  %622 = vmatprep.mubr.f32.mxu0 0.0
  %623 = vmatmul.mubr.f32.gmra.mrb[0].mxu0 %v259
  %v624 = vpop.f32.mrb[0].mxu0
  %v625 = vadd.f32 %v93, %v624
  %v626 = vpop.f32.mrb[0].mxu0
  %627 = vmatprep.mubr.f32.mxu0 0.0
  %628 = vmatmul.mubr.f32.gmra.mrb[0].mxu0 %v262
  %v629 = vpop.f32.mrb[0].mxu0
  %v630 = vadd.f32 %v93, %v629
  %v631 = vpop.f32.mrb[0].mxu0
  %632 = vmatprep.mubr.f32.mxu0 0.0
  %633 = vmatmul.mubr.f32.gmra.mrb[0].mxu0 %v265
  %v634 = vpop.f32.mrb[0].mxu0
  %v635 = vadd.f32 %v93, %v634
  %v636 = vpop.f32.mrb[0].mxu0
  %637 = vmatprep.mubr.f32.mxu0 0.0
  %638 = vmatmul.mubr.f32.gmra.mrb[0].mxu0 %v268
  %v639 = vpop.f32.mrb[0].mxu0
  %v640 = vadd.f32 %v93, %v639
  %v641 = vpop.f32.mrb[0].mxu0
  %642 = vmatprep.mubr.f32.mxu0 0.0
  %643 = vmatmul.mubr.f32.gmra.mrb[0].mxu0 %v271
  %v644 = vpop.f32.mrb[0].mxu0
  %v645 = vadd.f32 %v93, %v644
  %v646 = vpop.f32.mrb[0].mxu0
  %647 = vmatprep.mubr.f32.mxu0 0.0
  %648 = vmatmul.mubr.f32.gmra.mrb[0].mxu0 %v274
  %v649 = vpop.f32.mrb[0].mxu0
  %v650 = vadd.f32 %v93, %v649
  %v651 = vpop.f32.mrb[0].mxu0
  %652 = vmatprep.mubr.f32.mxu0 0.0
  %653 = vmatmul.mubr.f32.gmra.mrb[0].mxu0 %v277
  %v654 = vpop.f32.mrb[0].mxu0
  %v655 = vadd.f32 %v93, %v654
  %v656 = vpop.f32.mrb[0].mxu0
  %657 = vmatprep.mubr.f32.mxu0 0.0
  %658 = vmatmul.mubr.f32.gmra.mrb[0].mxu0 %v280
  %v659 = vpop.f32.mrb[0].mxu0
  %v660 = vadd.f32 %v93, %v659
  %v661 = vpop.f32.mrb[0].mxu0
  %662 = vmatprep.mubr.f32.mxu0 0.0
  %663 = vmatmul.mubr.f32.gmra.mrb[0].mxu0 %v283
  %v664 = vpop.f32.mrb[0].mxu0
  %v665 = vadd.f32 %v93, %v664
  %v666 = vpop.f32.mrb[0].mxu0
  %667 = vmatprep.mubr.f32.mxu0 0.0
  %668 = vmatmul.mubr.f32.gmra.mrb[0].mxu0 %v286
  %v669 = vpop.f32.mrb[0].mxu0
  %v670 = vadd.f32 %v93, %v669
  %v671 = vpop.f32.mrb[0].mxu0
  %672 = vdwg.mxu0
  %v673 = vmax.f32 %v355, 0.0
  %v674 = vmax.f32 %v360, 0.0
  %v675 = vmax.f32 %v365, 0.0
  %v676 = vmax.f32 %v370, 0.0
  %v677 = vmax.f32 %v375, 0.0
  %v678 = vmax.f32 %v380, 0.0
  %v679 = vmax.f32 %v385, 0.0
  %v680 = vmax.f32 %v390, 0.0
  %v681 = vmax.f32 %v395, 0.0
  %v682 = vmax.f32 %v400, 0.0
  %v683 = vmax.f32 %v405, 0.0
  %v684 = vmax.f32 %v410, 0.0
  %v685 = vmax.f32 %v415, 0.0
  %v686 = vmax.f32 %v420, 0.0
  %v687 = vmax.f32 %v425, 0.0
  %v688 = vmax.f32 %v430, 0.0
  %v689 = vmax.f32 %v435, 0.0
  %v690 = vmax.f32 %v440, 0.0
  %v691 = vmax.f32 %v445, 0.0
  %v692 = vmax.f32 %v450, 0.0
  %v693 = vmax.f32 %v455, 0.0
  %v694 = vmax.f32 %v460, 0.0
  %v695 = vmax.f32 %v465, 0.0
  %v696 = vmax.f32 %v470, 0.0
  %v697 = vmax.f32 %v475, 0.0
  %v698 = vmax.f32 %v480, 0.0
  %v699 = vmax.f32 %v485, 0.0
  %v700 = vmax.f32 %v490, 0.0
  %v701 = vmax.f32 %v495, 0.0
  %v702 = vmax.f32 %v500, 0.0
  %v703 = vmax.f32 %v505, 0.0
  %v704 = vmax.f32 %v510, 0.0
  %v705 = vmax.f32 %v515, 0.0
  %v706 = vmax.f32 %v520, 0.0
  %v707 = vmax.f32 %v525, 0.0
  %v708 = vmax.f32 %v530, 0.0
  %v709 = vmax.f32 %v535, 0.0
  %v710 = vmax.f32 %v540, 0.0
  %v711 = vmax.f32 %v545, 0.0
  %v712 = vmax.f32 %v550, 0.0
  %v713 = vmax.f32 %v555, 0.0
  %v714 = vmax.f32 %v560, 0.0
  %v715 = vmax.f32 %v565, 0.0
  %v716 = vmax.f32 %v570, 0.0
  %v717 = vmax.f32 %v575, 0.0
  %v718 = vmax.f32 %v580, 0.0
  %v719 = vmax.f32 %v585, 0.0
  %v720 = vmax.f32 %v590, 0.0
  %v721 = vmax.f32 %v595, 0.0
  %v722 = vmax.f32 %v600, 0.0
  %v723 = vmax.f32 %v605, 0.0
  %v724 = vmax.f32 %v610, 0.0
  %v725 = vmax.f32 %v615, 0.0
  %v726 = vmax.f32 %v620, 0.0
  %v727 = vmax.f32 %v625, 0.0
  %v728 = vmax.f32 %v630, 0.0
  %v729 = vmax.f32 %v635, 0.0
  %v730 = vmax.f32 %v640, 0.0
  %v731 = vmax.f32 %v645, 0.0
  %v732 = vmax.f32 %v650, 0.0
  %v733 = vmax.f32 %v655, 0.0
  %v734 = vmax.f32 %v660, 0.0
  %v735 = vmax.f32 %v665, 0.0
  %v736 = vmax.f32 %v670, 0.0
  %v737 = vld [vmem:[%s3] sm:$0xff]
  %v738 = vld [vmem:[%s3 + $0x8] sm:$0xff]
  %v739 = vld [vmem:[%s3 + $0x10] sm:$0xff]
  %v740 = vld [vmem:[%s3 + $0x18] sm:$0xff]
  %v741 = vld [vmem:[%s3 + $0x20] sm:$0xff]
  %v742 = vld [vmem:[%s3 + $0x28] sm:$0xff]
  %v743 = vld [vmem:[%s3 + $0x30] sm:$0xff]
  %v744 = vld [vmem:[%s3 + $0x38] sm:$0xff]
  %v745 = vld [vmem:[%s4] sm:$0x1]
  %v747 = vlaneseq
  %v748 = vshrl.u32 %v747, 7
  %v749 = vsub.s32 0, %v748
  %v750 = vrot.slane %v745, %v749
  %vm752 = vcmask 523264
  %v754 = vsel %vm752, %v673, 0
  %v757 = vsel %vm752, %v674, 0
  %v760 = vsel %vm752, %v675, 0
  %v763 = vsel %vm752, %v676, 0
  %v766 = vsel %vm752, %v677, 0
  %v769 = vsel %vm752, %v678, 0
  %v772 = vsel %vm752, %v679, 0
  %v775 = vsel %vm752, %v680, 0
  %v778 = vsel %vm752, %v681, 0
  %v781 = vsel %vm752, %v682, 0
  %v784 = vsel %vm752, %v683, 0
  %v787 = vsel %vm752, %v684, 0
  %v790 = vsel %vm752, %v685, 0
  %v793 = vsel %vm752, %v686, 0
  %v796 = vsel %vm752, %v687, 0
  %v799 = vsel %vm752, %v688, 0
  %v802 = vsel %vm752, %v689, 0
  %v805 = vsel %vm752, %v690, 0
  %v808 = vsel %vm752, %v691, 0
  %v811 = vsel %vm752, %v692, 0
  %v814 = vsel %vm752, %v693, 0
  %v817 = vsel %vm752, %v694, 0
  %v820 = vsel %vm752, %v695, 0
  %v823 = vsel %vm752, %v696, 0
  %v826 = vsel %vm752, %v697, 0
  %v829 = vsel %vm752, %v698, 0
  %v832 = vsel %vm752, %v699, 0
  %v835 = vsel %vm752, %v700, 0
  %v838 = vsel %vm752, %v701, 0
  %v841 = vsel %vm752, %v702, 0
  %v844 = vsel %vm752, %v703, 0
  %v847 = vsel %vm752, %v704, 0
  %v850 = vsel %vm752, %v705, 0
  %v853 = vsel %vm752, %v706, 0
  %v856 = vsel %vm752, %v707, 0
  %v859 = vsel %vm752, %v708, 0
  %v862 = vsel %vm752, %v709, 0
  %v865 = vsel %vm752, %v710, 0
  %v868 = vsel %vm752, %v711, 0
  %v871 = vsel %vm752, %v712, 0
  %v874 = vsel %vm752, %v713, 0
  %v877 = vsel %vm752, %v714, 0
  %v880 = vsel %vm752, %v715, 0
  %v883 = vsel %vm752, %v716, 0
  %v886 = vsel %vm752, %v717, 0
  %v889 = vsel %vm752, %v718, 0
  %v892 = vsel %vm752, %v719, 0
  %v895 = vsel %vm752, %v720, 0
  %v898 = vsel %vm752, %v721, 0
  %v901 = vsel %vm752, %v722, 0
  %v904 = vsel %vm752, %v723, 0
  %v907 = vsel %vm752, %v724, 0
  %v910 = vsel %vm752, %v725, 0
  %v913 = vsel %vm752, %v726, 0
  %v916 = vsel %vm752, %v727, 0
  %v919 = vsel %vm752, %v728, 0
  %v922 = vsel %vm752, %v729, 0
  %v925 = vsel %vm752, %v730, 0
  %v928 = vsel %vm752, %v731, 0
  %v931 = vsel %vm752, %v732, 0
  %v934 = vsel %vm752, %v733, 0
  %v937 = vsel %vm752, %v734, 0
  %v940 = vsel %vm752, %v735, 0
  %v943 = vsel %vm752, %v736, 0
  %945 = vmatprep.subr.mxu0 0.0
  %946 = vmatpush1.msra.mxu0 %v737
  %947 = vmatprep.subr.mxu0 0.0
  %948 = vmatpush1.msra.mxu0 %v738
  %949 = vmatprep.subr.mxu0 0.0
  %950 = vmatpush1.msra.mxu0 %v739
  %951 = vmatprep.subr.mxu0 0.0
  %952 = vmatpush1.msra.mxu0 %v740
  %953 = vmatprep.subr.mxu0 0.0
  %954 = vmatpush1.msra.mxu0 %v741
  %955 = vmatprep.subr.mxu0 0.0
  %956 = vmatpush1.msra.mxu0 %v742
  %957 = vmatprep.subr.mxu0 0.0
  %958 = vmatpush1.msra.mxu0 %v743
  %959 = vmatprep.subr.mxu0 0.0
  %960 = vmatpush1.msra.mxu0 %v744
  %961 = vmatprep.subr.mxu0 0.0
  %962 = vmatpush1.msra.mxu0 0.0
  %963 = vmatprep.subr.mxu0 0.0
  %964 = vmatpush1.msra.mxu0 0.0
  %965 = vmatprep.subr.mxu0 0.0
  %966 = vmatpush1.msra.mxu0 0.0
  %967 = vmatprep.subr.mxu0 0.0
  %968 = vmatpush1.msra.mxu0 0.0
  %969 = vmatprep.subr.mxu0 0.0
  %970 = vmatpush1.msra.mxu0 0.0
  %971 = vmatprep.subr.mxu0 0.0
  %972 = vmatpush1.msra.mxu0 0.0
  %973 = vmatprep.subr.mxu0 0.0
  %974 = vmatpush1.msra.mxu0 0.0
  %975 = vmatprep.subr.mxu0 0.0
  %976 = vmatpush1.msra.mxu0 0.0
  %977 = vmatprep.subr.mxu0 0.0
  %978 = vmatpush1.msra.mxu0 0.0
  %979 = vmatprep.subr.mxu0 0.0
  %980 = vmatpush1.msra.mxu0 0.0
  %981 = vmatprep.subr.mxu0 0.0
  %982 = vmatpush1.msra.mxu0 0.0
  %983 = vmatprep.subr.mxu0 0.0
  %984 = vmatpush1.msra.mxu0 0.0
  %985 = vmatprep.subr.mxu0 0.0
  %986 = vmatpush1.msra.mxu0 0.0
  %987 = vmatprep.subr.mxu0 0.0
  %988 = vmatpush1.msra.mxu0 0.0
  %989 = vmatprep.subr.mxu0 0.0
  %990 = vmatpush1.msra.mxu0 0.0
  %991 = vmatprep.subr.mxu0 0.0
  %992 = vmatpush1.msra.mxu0 0.0
  %993 = vmatprep.subr.mxu0 0.0
  %994 = vmatpush1.msra.mxu0 0.0
  %995 = vmatprep.subr.mxu0 0.0
  %996 = vmatpush1.msra.mxu0 0.0
  %997 = vmatprep.subr.mxu0 0.0
  %998 = vmatpush1.msra.mxu0 0.0
  %999 = vmatprep.subr.mxu0 0.0
  %1000 = vmatpush1.msra.mxu0 0.0
  %1001 = vmatprep.subr.mxu0 0.0
  %1002 = vmatpush1.msra.mxu0 0.0
  %1003 = vmatprep.subr.mxu0 0.0
  %1004 = vmatpush1.msra.mxu0 0.0
  %1005 = vmatprep.subr.mxu0 0.0
  %1006 = vmatpush1.msra.mxu0 0.0
  %1007 = vmatprep.subr.mxu0 0.0
  %1008 = vmatpush1.msra.mxu0 0.0
  %1009 = vmatprep.mubr.f32.mxu0 0.0
  %1010 = vmatmul.mubr.f32.gmra.mrb[0].mxu0 %v754
  %v1011 = vpop.f32.mrb[0].mxu0
  %v1012 = vadd.f32 %v750, %v1011
  %v1013 = vpop.f32.mrb[0].mxu0
  %1014 = vmatprep.mubr.f32.mxu0 0.0
  %1015 = vmatmul.mubr.f32.gmra.mrb[0].mxu0 %v757
  %v1016 = vpop.f32.mrb[0].mxu0
  %v1017 = vadd.f32 %v750, %v1016
  %v1018 = vpop.f32.mrb[0].mxu0
  %1019 = vmatprep.mubr.f32.mxu0 0.0
  %1020 = vmatmul.mubr.f32.gmra.mrb[0].mxu0 %v760
  %v1021 = vpop.f32.mrb[0].mxu0
  %v1022 = vadd.f32 %v750, %v1021
  %v1023 = vpop.f32.mrb[0].mxu0
  %1024 = vmatprep.mubr.f32.mxu0 0.0
  %1025 = vmatmul.mubr.f32.gmra.mrb[0].mxu0 %v763
  %v1026 = vpop.f32.mrb[0].mxu0
  %v1027 = vadd.f32 %v750, %v1026
  %v1028 = vpop.f32.mrb[0].mxu0
  %1029 = vmatprep.mubr.f32.mxu0 0.0
  %1030 = vmatmul.mubr.f32.gmra.mrb[0].mxu0 %v766
  %v1031 = vpop.f32.mrb[0].mxu0
  %v1032 = vadd.f32 %v750, %v1031
  %v1033 = vpop.f32.mrb[0].mxu0
  %1034 = vmatprep.mubr.f32.mxu0 0.0
  %1035 = vmatmul.mubr.f32.gmra.mrb[0].mxu0 %v769
  %v1036 = vpop.f32.mrb[0].mxu0
  %v1037 = vadd.f32 %v750, %v1036
  %v1038 = vpop.f32.mrb[0].mxu0
  %1039 = vmatprep.mubr.f32.mxu0 0.0
  %1040 = vmatmul.mubr.f32.gmra.mrb[0].mxu0 %v772
  %v1041 = vpop.f32.mrb[0].mxu0
  %v1042 = vadd.f32 %v750, %v1041
  %v1043 = vpop.f32.mrb[0].mxu0
  %1044 = vmatprep.mubr.f32.mxu0 0.0
  %1045 = vmatmul.mubr.f32.gmra.mrb[0].mxu0 %v775
  %v1046 = vpop.f32.mrb[0].mxu0
  %v1047 = vadd.f32 %v750, %v1046
  %v1048 = vpop.f32.mrb[0].mxu0
  %1049 = vmatprep.mubr.f32.mxu0 0.0
  %1050 = vmatmul.mubr.f32.gmra.mrb[0].mxu0 %v778
  %v1051 = vpop.f32.mrb[0].mxu0
  %v1052 = vadd.f32 %v750, %v1051
  %v1053 = vpop.f32.mrb[0].mxu0
  %1054 = vmatprep.mubr.f32.mxu0 0.0
  %1055 = vmatmul.mubr.f32.gmra.mrb[0].mxu0 %v781
  %v1056 = vpop.f32.mrb[0].mxu0
  %v1057 = vadd.f32 %v750, %v1056
  %v1058 = vpop.f32.mrb[0].mxu0
  %1059 = vmatprep.mubr.f32.mxu0 0.0
  %1060 = vmatmul.mubr.f32.gmra.mrb[0].mxu0 %v784
  %v1061 = vpop.f32.mrb[0].mxu0
  %v1062 = vadd.f32 %v750, %v1061
  %v1063 = vpop.f32.mrb[0].mxu0
  %1064 = vmatprep.mubr.f32.mxu0 0.0
  %1065 = vmatmul.mubr.f32.gmra.mrb[0].mxu0 %v787
  %v1066 = vpop.f32.mrb[0].mxu0
  %v1067 = vadd.f32 %v750, %v1066
  %v1068 = vpop.f32.mrb[0].mxu0
  %1069 = vmatprep.mubr.f32.mxu0 0.0
  %1070 = vmatmul.mubr.f32.gmra.mrb[0].mxu0 %v790
  %v1071 = vpop.f32.mrb[0].mxu0
  %v1072 = vadd.f32 %v750, %v1071
  %v1073 = vpop.f32.mrb[0].mxu0
  %1074 = vmatprep.mubr.f32.mxu0 0.0
  %1075 = vmatmul.mubr.f32.gmra.mrb[0].mxu0 %v793
  %v1076 = vpop.f32.mrb[0].mxu0
  %v1077 = vadd.f32 %v750, %v1076
  %v1078 = vpop.f32.mrb[0].mxu0
  %1079 = vmatprep.mubr.f32.mxu0 0.0
  %1080 = vmatmul.mubr.f32.gmra.mrb[0].mxu0 %v796
  %v1081 = vpop.f32.mrb[0].mxu0
  %v1082 = vadd.f32 %v750, %v1081
  %v1083 = vpop.f32.mrb[0].mxu0
  %1084 = vmatprep.mubr.f32.mxu0 0.0
  %1085 = vmatmul.mubr.f32.gmra.mrb[0].mxu0 %v799
  %v1086 = vpop.f32.mrb[0].mxu0
  %v1087 = vadd.f32 %v750, %v1086
  %v1088 = vpop.f32.mrb[0].mxu0
  %1089 = vmatprep.mubr.f32.mxu0 0.0
  %1090 = vmatmul.mubr.f32.gmra.mrb[0].mxu0 %v802
  %v1091 = vpop.f32.mrb[0].mxu0
  %v1092 = vadd.f32 %v750, %v1091
  %v1093 = vpop.f32.mrb[0].mxu0
  %1094 = vmatprep.mubr.f32.mxu0 0.0
  %1095 = vmatmul.mubr.f32.gmra.mrb[0].mxu0 %v805
  %v1096 = vpop.f32.mrb[0].mxu0
  %v1097 = vadd.f32 %v750, %v1096
  %v1098 = vpop.f32.mrb[0].mxu0
  %1099 = vmatprep.mubr.f32.mxu0 0.0
  %1100 = vmatmul.mubr.f32.gmra.mrb[0].mxu0 %v808
  %v1101 = vpop.f32.mrb[0].mxu0
  %v1102 = vadd.f32 %v750, %v1101
  %v1103 = vpop.f32.mrb[0].mxu0
  %1104 = vmatprep.mubr.f32.mxu0 0.0
  %1105 = vmatmul.mubr.f32.gmra.mrb[0].mxu0 %v811
  %v1106 = vpop.f32.mrb[0].mxu0
  %v1107 = vadd.f32 %v750, %v1106
  %v1108 = vpop.f32.mrb[0].mxu0
  %1109 = vmatprep.mubr.f32.mxu0 0.0
  %1110 = vmatmul.mubr.f32.gmra.mrb[0].mxu0 %v814
  %v1111 = vpop.f32.mrb[0].mxu0
  %v1112 = vadd.f32 %v750, %v1111
  %v1113 = vpop.f32.mrb[0].mxu0
  %1114 = vmatprep.mubr.f32.mxu0 0.0
  %1115 = vmatmul.mubr.f32.gmra.mrb[0].mxu0 %v817
  %v1116 = vpop.f32.mrb[0].mxu0
  %v1117 = vadd.f32 %v750, %v1116
  %v1118 = vpop.f32.mrb[0].mxu0
  %1119 = vmatprep.mubr.f32.mxu0 0.0
  %1120 = vmatmul.mubr.f32.gmra.mrb[0].mxu0 %v820
  %v1121 = vpop.f32.mrb[0].mxu0
  %v1122 = vadd.f32 %v750, %v1121
  %v1123 = vpop.f32.mrb[0].mxu0
  %1124 = vmatprep.mubr.f32.mxu0 0.0
  %1125 = vmatmul.mubr.f32.gmra.mrb[0].mxu0 %v823
  %v1126 = vpop.f32.mrb[0].mxu0
  %v1127 = vadd.f32 %v750, %v1126
  %v1128 = vpop.f32.mrb[0].mxu0
  %1129 = vmatprep.mubr.f32.mxu0 0.0
  %1130 = vmatmul.mubr.f32.gmra.mrb[0].mxu0 %v826
  %v1131 = vpop.f32.mrb[0].mxu0
  %v1132 = vadd.f32 %v750, %v1131
  %v1133 = vpop.f32.mrb[0].mxu0
  %1134 = vmatprep.mubr.f32.mxu0 0.0
  %1135 = vmatmul.mubr.f32.gmra.mrb[0].mxu0 %v829
  %v1136 = vpop.f32.mrb[0].mxu0
  %v1137 = vadd.f32 %v750, %v1136
  %v1138 = vpop.f32.mrb[0].mxu0
  %1139 = vmatprep.mubr.f32.mxu0 0.0
  %1140 = vmatmul.mubr.f32.gmra.mrb[0].mxu0 %v832
  %v1141 = vpop.f32.mrb[0].mxu0
  %v1142 = vadd.f32 %v750, %v1141
  %v1143 = vpop.f32.mrb[0].mxu0
  %1144 = vmatprep.mubr.f32.mxu0 0.0
  %1145 = vmatmul.mubr.f32.gmra.mrb[0].mxu0 %v835
  %v1146 = vpop.f32.mrb[0].mxu0
  %v1147 = vadd.f32 %v750, %v1146
  %v1148 = vpop.f32.mrb[0].mxu0
  %1149 = vmatprep.mubr.f32.mxu0 0.0
  %1150 = vmatmul.mubr.f32.gmra.mrb[0].mxu0 %v838
  %v1151 = vpop.f32.mrb[0].mxu0
  %v1152 = vadd.f32 %v750, %v1151
  %v1153 = vpop.f32.mrb[0].mxu0
  %1154 = vmatprep.mubr.f32.mxu0 0.0
  %1155 = vmatmul.mubr.f32.gmra.mrb[0].mxu0 %v841
  %v1156 = vpop.f32.mrb[0].mxu0
  %v1157 = vadd.f32 %v750, %v1156
  %v1158 = vpop.f32.mrb[0].mxu0
  %1159 = vmatprep.mubr.f32.mxu0 0.0
  %1160 = vmatmul.mubr.f32.gmra.mrb[0].mxu0 %v844
  %v1161 = vpop.f32.mrb[0].mxu0
  %v1162 = vadd.f32 %v750, %v1161
  %v1163 = vpop.f32.mrb[0].mxu0
  %1164 = vmatprep.mubr.f32.mxu0 0.0
  %1165 = vmatmul.mubr.f32.gmra.mrb[0].mxu0 %v847
  %v1166 = vpop.f32.mrb[0].mxu0
  %v1167 = vadd.f32 %v750, %v1166
  %v1168 = vpop.f32.mrb[0].mxu0
  %1169 = vmatprep.mubr.f32.mxu0 0.0
  %1170 = vmatmul.mubr.f32.gmra.mrb[0].mxu0 %v850
  %v1171 = vpop.f32.mrb[0].mxu0
  %v1172 = vadd.f32 %v750, %v1171
  %v1173 = vpop.f32.mrb[0].mxu0
  %1174 = vmatprep.mubr.f32.mxu0 0.0
  %1175 = vmatmul.mubr.f32.gmra.mrb[0].mxu0 %v853
  %v1176 = vpop.f32.mrb[0].mxu0
  %v1177 = vadd.f32 %v750, %v1176
  %v1178 = vpop.f32.mrb[0].mxu0
  %1179 = vmatprep.mubr.f32.mxu0 0.0
  %1180 = vmatmul.mubr.f32.gmra.mrb[0].mxu0 %v856
  %v1181 = vpop.f32.mrb[0].mxu0
  %v1182 = vadd.f32 %v750, %v1181
  %v1183 = vpop.f32.mrb[0].mxu0
  %1184 = vmatprep.mubr.f32.mxu0 0.0
  %1185 = vmatmul.mubr.f32.gmra.mrb[0].mxu0 %v859
  %v1186 = vpop.f32.mrb[0].mxu0
  %v1187 = vadd.f32 %v750, %v1186
  %v1188 = vpop.f32.mrb[0].mxu0
  %1189 = vmatprep.mubr.f32.mxu0 0.0
  %1190 = vmatmul.mubr.f32.gmra.mrb[0].mxu0 %v862
  %v1191 = vpop.f32.mrb[0].mxu0
  %v1192 = vadd.f32 %v750, %v1191
  %v1193 = vpop.f32.mrb[0].mxu0
  %1194 = vmatprep.mubr.f32.mxu0 0.0
  %1195 = vmatmul.mubr.f32.gmra.mrb[0].mxu0 %v865
  %v1196 = vpop.f32.mrb[0].mxu0
  %v1197 = vadd.f32 %v750, %v1196
  %v1198 = vpop.f32.mrb[0].mxu0
  %1199 = vmatprep.mubr.f32.mxu0 0.0
  %1200 = vmatmul.mubr.f32.gmra.mrb[0].mxu0 %v868
  %v1201 = vpop.f32.mrb[0].mxu0
  %v1202 = vadd.f32 %v750, %v1201
  %v1203 = vpop.f32.mrb[0].mxu0
  %1204 = vmatprep.mubr.f32.mxu0 0.0
  %1205 = vmatmul.mubr.f32.gmra.mrb[0].mxu0 %v871
  %v1206 = vpop.f32.mrb[0].mxu0
  %v1207 = vadd.f32 %v750, %v1206
  %v1208 = vpop.f32.mrb[0].mxu0
  %1209 = vmatprep.mubr.f32.mxu0 0.0
  %1210 = vmatmul.mubr.f32.gmra.mrb[0].mxu0 %v874
  %v1211 = vpop.f32.mrb[0].mxu0
  %v1212 = vadd.f32 %v750, %v1211
  %v1213 = vpop.f32.mrb[0].mxu0
  %1214 = vmatprep.mubr.f32.mxu0 0.0
  %1215 = vmatmul.mubr.f32.gmra.mrb[0].mxu0 %v877
  %v1216 = vpop.f32.mrb[0].mxu0
  %v1217 = vadd.f32 %v750, %v1216
  %v1218 = vpop.f32.mrb[0].mxu0
  %1219 = vmatprep.mubr.f32.mxu0 0.0
  %1220 = vmatmul.mubr.f32.gmra.mrb[0].mxu0 %v880
  %v1221 = vpop.f32.mrb[0].mxu0
  %v1222 = vadd.f32 %v750, %v1221
  %v1223 = vpop.f32.mrb[0].mxu0
  %1224 = vmatprep.mubr.f32.mxu0 0.0
  %1225 = vmatmul.mubr.f32.gmra.mrb[0].mxu0 %v883
  %v1226 = vpop.f32.mrb[0].mxu0
  %v1227 = vadd.f32 %v750, %v1226
  %v1228 = vpop.f32.mrb[0].mxu0
  %1229 = vmatprep.mubr.f32.mxu0 0.0
  %1230 = vmatmul.mubr.f32.gmra.mrb[0].mxu0 %v886
  %v1231 = vpop.f32.mrb[0].mxu0
  %v1232 = vadd.f32 %v750, %v1231
  %v1233 = vpop.f32.mrb[0].mxu0
  %1234 = vmatprep.mubr.f32.mxu0 0.0
  %1235 = vmatmul.mubr.f32.gmra.mrb[0].mxu0 %v889
  %v1236 = vpop.f32.mrb[0].mxu0
  %v1237 = vadd.f32 %v750, %v1236
  %v1238 = vpop.f32.mrb[0].mxu0
  %1239 = vmatprep.mubr.f32.mxu0 0.0
  %1240 = vmatmul.mubr.f32.gmra.mrb[0].mxu0 %v892
  %v1241 = vpop.f32.mrb[0].mxu0
  %v1242 = vadd.f32 %v750, %v1241
  %v1243 = vpop.f32.mrb[0].mxu0
  %1244 = vmatprep.mubr.f32.mxu0 0.0
  %1245 = vmatmul.mubr.f32.gmra.mrb[0].mxu0 %v895
  %v1246 = vpop.f32.mrb[0].mxu0
  %v1247 = vadd.f32 %v750, %v1246
  %v1248 = vpop.f32.mrb[0].mxu0
  %1249 = vmatprep.mubr.f32.mxu0 0.0
  %1250 = vmatmul.mubr.f32.gmra.mrb[0].mxu0 %v898
  %v1251 = vpop.f32.mrb[0].mxu0
  %v1252 = vadd.f32 %v750, %v1251
  %v1253 = vpop.f32.mrb[0].mxu0
  %1254 = vmatprep.mubr.f32.mxu0 0.0
  %1255 = vmatmul.mubr.f32.gmra.mrb[0].mxu0 %v901
  %v1256 = vpop.f32.mrb[0].mxu0
  %v1257 = vadd.f32 %v750, %v1256
  %v1258 = vpop.f32.mrb[0].mxu0
  %1259 = vmatprep.mubr.f32.mxu0 0.0
  %1260 = vmatmul.mubr.f32.gmra.mrb[0].mxu0 %v904
  %v1261 = vpop.f32.mrb[0].mxu0
  %v1262 = vadd.f32 %v750, %v1261
  %v1263 = vpop.f32.mrb[0].mxu0
  %1264 = vmatprep.mubr.f32.mxu0 0.0
  %1265 = vmatmul.mubr.f32.gmra.mrb[0].mxu0 %v907
  %v1266 = vpop.f32.mrb[0].mxu0
  %v1267 = vadd.f32 %v750, %v1266
  %v1268 = vpop.f32.mrb[0].mxu0
  %1269 = vmatprep.mubr.f32.mxu0 0.0
  %1270 = vmatmul.mubr.f32.gmra.mrb[0].mxu0 %v910
  %v1271 = vpop.f32.mrb[0].mxu0
  %v1272 = vadd.f32 %v750, %v1271
  %v1273 = vpop.f32.mrb[0].mxu0
  %1274 = vmatprep.mubr.f32.mxu0 0.0
  %1275 = vmatmul.mubr.f32.gmra.mrb[0].mxu0 %v913
  %v1276 = vpop.f32.mrb[0].mxu0
  %v1277 = vadd.f32 %v750, %v1276
  %v1278 = vpop.f32.mrb[0].mxu0
  %1279 = vmatprep.mubr.f32.mxu0 0.0
  %1280 = vmatmul.mubr.f32.gmra.mrb[0].mxu0 %v916
  %v1281 = vpop.f32.mrb[0].mxu0
  %v1282 = vadd.f32 %v750, %v1281
  %v1283 = vpop.f32.mrb[0].mxu0
  %1284 = vmatprep.mubr.f32.mxu0 0.0
  %1285 = vmatmul.mubr.f32.gmra.mrb[0].mxu0 %v919
  %v1286 = vpop.f32.mrb[0].mxu0
  %v1287 = vadd.f32 %v750, %v1286
  %v1288 = vpop.f32.mrb[0].mxu0
  %1289 = vmatprep.mubr.f32.mxu0 0.0
  %1290 = vmatmul.mubr.f32.gmra.mrb[0].mxu0 %v922
  %v1291 = vpop.f32.mrb[0].mxu0
  %v1292 = vadd.f32 %v750, %v1291
  %v1293 = vpop.f32.mrb[0].mxu0
  %1294 = vmatprep.mubr.f32.mxu0 0.0
  %1295 = vmatmul.mubr.f32.gmra.mrb[0].mxu0 %v925
  %v1296 = vpop.f32.mrb[0].mxu0
  %v1297 = vadd.f32 %v750, %v1296
  %v1298 = vpop.f32.mrb[0].mxu0
  %1299 = vmatprep.mubr.f32.mxu0 0.0
  %1300 = vmatmul.mubr.f32.gmra.mrb[0].mxu0 %v928
  %v1301 = vpop.f32.mrb[0].mxu0
  %v1302 = vadd.f32 %v750, %v1301
  %v1303 = vpop.f32.mrb[0].mxu0
  %1304 = vmatprep.mubr.f32.mxu0 0.0
  %1305 = vmatmul.mubr.f32.gmra.mrb[0].mxu0 %v931
  %v1306 = vpop.f32.mrb[0].mxu0
  %v1307 = vadd.f32 %v750, %v1306
  %v1308 = vpop.f32.mrb[0].mxu0
  %1309 = vmatprep.mubr.f32.mxu0 0.0
  %1310 = vmatmul.mubr.f32.gmra.mrb[0].mxu0 %v934
  %v1311 = vpop.f32.mrb[0].mxu0
  %v1312 = vadd.f32 %v750, %v1311
  %v1313 = vpop.f32.mrb[0].mxu0
  %1314 = vmatprep.mubr.f32.mxu0 0.0
  %1315 = vmatmul.mubr.f32.gmra.mrb[0].mxu0 %v937
  %v1316 = vpop.f32.mrb[0].mxu0
  %v1317 = vadd.f32 %v750, %v1316
  %v1318 = vpop.f32.mrb[0].mxu0
  %1319 = vmatprep.mubr.f32.mxu0 0.0
  %1320 = vmatmul.mubr.f32.gmra.mrb[0].mxu0 %v940
  %v1321 = vpop.f32.mrb[0].mxu0
  %v1322 = vadd.f32 %v750, %v1321
  %v1323 = vpop.f32.mrb[0].mxu0
  %1324 = vmatprep.mubr.f32.mxu0 0.0
  %1325 = vmatmul.mubr.f32.gmra.mrb[0].mxu0 %v943
  %v1326 = vpop.f32.mrb[0].mxu0
  %v1327 = vadd.f32 %v750, %v1326
  %v1328 = vpop.f32.mrb[0].mxu0
  %1329 = vdwg.mxu0
  %vm1330 = vcmask 130048
  %v1331 = vsel %vm1330, %v1012, -inf
  %1332 = vmax.xlane.f32.xlu0 %v1331
  %v1333 = vpop.xlane.xlu0 %1332
  %v1334 = vsel %vm1330, %v1017, -inf
  %1335 = vmax.xlane.f32.xlu0 %v1334
  %v1336 = vpop.xlane.xlu0 %1335
  %v1337 = vsel %vm1330, %v1022, -inf
  %1338 = vmax.xlane.f32.xlu0 %v1337
  %v1339 = vpop.xlane.xlu0 %1338
  %v1340 = vsel %vm1330, %v1027, -inf
  %1341 = vmax.xlane.f32.xlu0 %v1340
  %v1342 = vpop.xlane.xlu0 %1341
  %v1343 = vsel %vm1330, %v1032, -inf
  %1344 = vmax.xlane.f32.xlu0 %v1343
  %v1345 = vpop.xlane.xlu0 %1344
  %v1346 = vsel %vm1330, %v1037, -inf
  %1347 = vmax.xlane.f32.xlu0 %v1346
  %v1348 = vpop.xlane.xlu0 %1347
  %v1349 = vsel %vm1330, %v1042, -inf
  %1350 = vmax.xlane.f32.xlu0 %v1349
  %v1351 = vpop.xlane.xlu0 %1350
  %v1352 = vsel %vm1330, %v1047, -inf
  %1353 = vmax.xlane.f32.xlu0 %v1352
  %v1354 = vpop.xlane.xlu0 %1353
  %v1355 = vsel %vm1330, %v1052, -inf
  %1356 = vmax.xlane.f32.xlu0 %v1355
  %v1357 = vpop.xlane.xlu0 %1356
  %v1358 = vsel %vm1330, %v1057, -inf
  %1359 = vmax.xlane.f32.xlu0 %v1358
  %v1360 = vpop.xlane.xlu0 %1359
  %v1361 = vsel %vm1330, %v1062, -inf
  %1362 = vmax.xlane.f32.xlu0 %v1361
  %v1363 = vpop.xlane.xlu0 %1362
  %v1364 = vsel %vm1330, %v1067, -inf
  %1365 = vmax.xlane.f32.xlu0 %v1364
  %v1366 = vpop.xlane.xlu0 %1365
  %v1367 = vsel %vm1330, %v1072, -inf
  %1368 = vmax.xlane.f32.xlu0 %v1367
  %v1369 = vpop.xlane.xlu0 %1368
  %v1370 = vsel %vm1330, %v1077, -inf
  %1371 = vmax.xlane.f32.xlu0 %v1370
  %v1372 = vpop.xlane.xlu0 %1371
  %v1373 = vsel %vm1330, %v1082, -inf
  %1374 = vmax.xlane.f32.xlu0 %v1373
  %v1375 = vpop.xlane.xlu0 %1374
  %v1376 = vsel %vm1330, %v1087, -inf
  %1377 = vmax.xlane.f32.xlu0 %v1376
  %v1378 = vpop.xlane.xlu0 %1377
  %v1379 = vsel %vm1330, %v1092, -inf
  %1380 = vmax.xlane.f32.xlu0 %v1379
  %v1381 = vpop.xlane.xlu0 %1380
  %v1382 = vsel %vm1330, %v1097, -inf
  %1383 = vmax.xlane.f32.xlu0 %v1382
  %v1384 = vpop.xlane.xlu0 %1383
  %v1385 = vsel %vm1330, %v1102, -inf
  %1386 = vmax.xlane.f32.xlu0 %v1385
  %v1387 = vpop.xlane.xlu0 %1386
  %v1388 = vsel %vm1330, %v1107, -inf
  %1389 = vmax.xlane.f32.xlu0 %v1388
  %v1390 = vpop.xlane.xlu0 %1389
  %v1391 = vsel %vm1330, %v1112, -inf
  %1392 = vmax.xlane.f32.xlu0 %v1391
  %v1393 = vpop.xlane.xlu0 %1392
  %v1394 = vsel %vm1330, %v1117, -inf
  %1395 = vmax.xlane.f32.xlu0 %v1394
  %v1396 = vpop.xlane.xlu0 %1395
  %v1397 = vsel %vm1330, %v1122, -inf
  %1398 = vmax.xlane.f32.xlu0 %v1397
  %v1399 = vpop.xlane.xlu0 %1398
  %v1400 = vsel %vm1330, %v1127, -inf
  %1401 = vmax.xlane.f32.xlu0 %v1400
  %v1402 = vpop.xlane.xlu0 %1401
  %v1403 = vsel %vm1330, %v1132, -inf
  %1404 = vmax.xlane.f32.xlu0 %v1403
  %v1405 = vpop.xlane.xlu0 %1404
  %v1406 = vsel %vm1330, %v1137, -inf
  %1407 = vmax.xlane.f32.xlu0 %v1406
  %v1408 = vpop.xlane.xlu0 %1407
  %v1409 = vsel %vm1330, %v1142, -inf
  %1410 = vmax.xlane.f32.xlu0 %v1409
  %v1411 = vpop.xlane.xlu0 %1410
  %v1412 = vsel %vm1330, %v1147, -inf
  %1413 = vmax.xlane.f32.xlu0 %v1412
  %v1414 = vpop.xlane.xlu0 %1413
  %v1415 = vsel %vm1330, %v1152, -inf
  %1416 = vmax.xlane.f32.xlu0 %v1415
  %v1417 = vpop.xlane.xlu0 %1416
  %v1418 = vsel %vm1330, %v1157, -inf
  %1419 = vmax.xlane.f32.xlu0 %v1418
  %v1420 = vpop.xlane.xlu0 %1419
  %v1421 = vsel %vm1330, %v1162, -inf
  %1422 = vmax.xlane.f32.xlu0 %v1421
  %v1423 = vpop.xlane.xlu0 %1422
  %v1424 = vsel %vm1330, %v1167, -inf
  %1425 = vmax.xlane.f32.xlu0 %v1424
  %v1426 = vpop.xlane.xlu0 %1425
  %v1427 = vsel %vm1330, %v1172, -inf
  %1428 = vmax.xlane.f32.xlu0 %v1427
  %v1429 = vpop.xlane.xlu0 %1428
  %v1430 = vsel %vm1330, %v1177, -inf
  %1431 = vmax.xlane.f32.xlu0 %v1430
  %v1432 = vpop.xlane.xlu0 %1431
  %v1433 = vsel %vm1330, %v1182, -inf
  %1434 = vmax.xlane.f32.xlu0 %v1433
  %v1435 = vpop.xlane.xlu0 %1434
  %v1436 = vsel %vm1330, %v1187, -inf
  %1437 = vmax.xlane.f32.xlu0 %v1436
  %v1438 = vpop.xlane.xlu0 %1437
  %v1439 = vsel %vm1330, %v1192, -inf
  %1440 = vmax.xlane.f32.xlu0 %v1439
  %v1441 = vpop.xlane.xlu0 %1440
  %v1442 = vsel %vm1330, %v1197, -inf
  %1443 = vmax.xlane.f32.xlu0 %v1442
  %v1444 = vpop.xlane.xlu0 %1443
  %v1445 = vsel %vm1330, %v1202, -inf
  %1446 = vmax.xlane.f32.xlu0 %v1445
  %v1447 = vpop.xlane.xlu0 %1446
  %v1448 = vsel %vm1330, %v1207, -inf
  %1449 = vmax.xlane.f32.xlu0 %v1448
  %v1450 = vpop.xlane.xlu0 %1449
  %v1451 = vsel %vm1330, %v1212, -inf
  %1452 = vmax.xlane.f32.xlu0 %v1451
  %v1453 = vpop.xlane.xlu0 %1452
  %v1454 = vsel %vm1330, %v1217, -inf
  %1455 = vmax.xlane.f32.xlu0 %v1454
  %v1456 = vpop.xlane.xlu0 %1455
  %v1457 = vsel %vm1330, %v1222, -inf
  %1458 = vmax.xlane.f32.xlu0 %v1457
  %v1459 = vpop.xlane.xlu0 %1458
  %v1460 = vsel %vm1330, %v1227, -inf
  %1461 = vmax.xlane.f32.xlu0 %v1460
  %v1462 = vpop.xlane.xlu0 %1461
  %v1463 = vsel %vm1330, %v1232, -inf
  %1464 = vmax.xlane.f32.xlu0 %v1463
  %v1465 = vpop.xlane.xlu0 %1464
  %v1466 = vsel %vm1330, %v1237, -inf
  %1467 = vmax.xlane.f32.xlu0 %v1466
  %v1468 = vpop.xlane.xlu0 %1467
  %v1469 = vsel %vm1330, %v1242, -inf
  %1470 = vmax.xlane.f32.xlu0 %v1469
  %v1471 = vpop.xlane.xlu0 %1470
  %v1472 = vsel %vm1330, %v1247, -inf
  %1473 = vmax.xlane.f32.xlu0 %v1472
  %v1474 = vpop.xlane.xlu0 %1473
  %v1475 = vsel %vm1330, %v1252, -inf
  %1476 = vmax.xlane.f32.xlu0 %v1475
  %v1477 = vpop.xlane.xlu0 %1476
  %v1478 = vsel %vm1330, %v1257, -inf
  %1479 = vmax.xlane.f32.xlu0 %v1478
  %v1480 = vpop.xlane.xlu0 %1479
  %v1481 = vsel %vm1330, %v1262, -inf
  %1482 = vmax.xlane.f32.xlu0 %v1481
  %v1483 = vpop.xlane.xlu0 %1482
  %v1484 = vsel %vm1330, %v1267, -inf
  %1485 = vmax.xlane.f32.xlu0 %v1484
  %v1486 = vpop.xlane.xlu0 %1485
  %v1487 = vsel %vm1330, %v1272, -inf
  %1488 = vmax.xlane.f32.xlu0 %v1487
  %v1489 = vpop.xlane.xlu0 %1488
  %v1490 = vsel %vm1330, %v1277, -inf
  %1491 = vmax.xlane.f32.xlu0 %v1490
  %v1492 = vpop.xlane.xlu0 %1491
  %v1493 = vsel %vm1330, %v1282, -inf
  %1494 = vmax.xlane.f32.xlu0 %v1493
  %v1495 = vpop.xlane.xlu0 %1494
  %v1496 = vsel %vm1330, %v1287, -inf
  %1497 = vmax.xlane.f32.xlu0 %v1496
  %v1498 = vpop.xlane.xlu0 %1497
  %v1499 = vsel %vm1330, %v1292, -inf
  %1500 = vmax.xlane.f32.xlu0 %v1499
  %v1501 = vpop.xlane.xlu0 %1500
  %v1502 = vsel %vm1330, %v1297, -inf
  %1503 = vmax.xlane.f32.xlu0 %v1502
  %v1504 = vpop.xlane.xlu0 %1503
  %v1505 = vsel %vm1330, %v1302, -inf
  %1506 = vmax.xlane.f32.xlu0 %v1505
  %v1507 = vpop.xlane.xlu0 %1506
  %v1508 = vsel %vm1330, %v1307, -inf
  %1509 = vmax.xlane.f32.xlu0 %v1508
  %v1510 = vpop.xlane.xlu0 %1509
  %v1511 = vsel %vm1330, %v1312, -inf
  %1512 = vmax.xlane.f32.xlu0 %v1511
  %v1513 = vpop.xlane.xlu0 %1512
  %v1514 = vsel %vm1330, %v1317, -inf
  %1515 = vmax.xlane.f32.xlu0 %v1514
  %v1516 = vpop.xlane.xlu0 %1515
  %v1517 = vsel %vm1330, %v1322, -inf
  %1518 = vmax.xlane.f32.xlu0 %v1517
  %v1519 = vpop.xlane.xlu0 %1518
  %v1520 = vsel %vm1330, %v1327, -inf
  %1521 = vmax.xlane.f32.xlu0 %v1520
  %v1522 = vpop.xlane.xlu0 %1521
  %v1523 = vsub.f32 %v1012, %v1333
  %v1524 = vsub.f32 %v1017, %v1336
  %v1525 = vsub.f32 %v1022, %v1339
  %v1526 = vsub.f32 %v1027, %v1342
  %v1527 = vsub.f32 %v1032, %v1345
  %v1528 = vsub.f32 %v1037, %v1348
  %v1529 = vsub.f32 %v1042, %v1351
  %v1530 = vsub.f32 %v1047, %v1354
  %v1531 = vsub.f32 %v1052, %v1357
  %v1532 = vsub.f32 %v1057, %v1360
  %v1533 = vsub.f32 %v1062, %v1363
  %v1534 = vsub.f32 %v1067, %v1366
  %v1535 = vsub.f32 %v1072, %v1369
  %v1536 = vsub.f32 %v1077, %v1372
  %v1537 = vsub.f32 %v1082, %v1375
  %v1538 = vsub.f32 %v1087, %v1378
  %v1539 = vsub.f32 %v1092, %v1381
  %v1540 = vsub.f32 %v1097, %v1384
  %v1541 = vsub.f32 %v1102, %v1387
  %v1542 = vsub.f32 %v1107, %v1390
  %v1543 = vsub.f32 %v1112, %v1393
  %v1544 = vsub.f32 %v1117, %v1396
  %v1545 = vsub.f32 %v1122, %v1399
  %v1546 = vsub.f32 %v1127, %v1402
  %v1547 = vsub.f32 %v1132, %v1405
  %v1548 = vsub.f32 %v1137, %v1408
  %v1549 = vsub.f32 %v1142, %v1411
  %v1550 = vsub.f32 %v1147, %v1414
  %v1551 = vsub.f32 %v1152, %v1417
  %v1552 = vsub.f32 %v1157, %v1420
  %v1553 = vsub.f32 %v1162, %v1423
  %v1554 = vsub.f32 %v1167, %v1426
  %v1555 = vsub.f32 %v1172, %v1429
  %v1556 = vsub.f32 %v1177, %v1432
  %v1557 = vsub.f32 %v1182, %v1435
  %v1558 = vsub.f32 %v1187, %v1438
  %v1559 = vsub.f32 %v1192, %v1441
  %v1560 = vsub.f32 %v1197, %v1444
  %v1561 = vsub.f32 %v1202, %v1447
  %v1562 = vsub.f32 %v1207, %v1450
  %v1563 = vsub.f32 %v1212, %v1453
  %v1564 = vsub.f32 %v1217, %v1456
  %v1565 = vsub.f32 %v1222, %v1459
  %v1566 = vsub.f32 %v1227, %v1462
  %v1567 = vsub.f32 %v1232, %v1465
  %v1568 = vsub.f32 %v1237, %v1468
  %v1569 = vsub.f32 %v1242, %v1471
  %v1570 = vsub.f32 %v1247, %v1474
  %v1571 = vsub.f32 %v1252, %v1477
  %v1572 = vsub.f32 %v1257, %v1480
  %v1573 = vsub.f32 %v1262, %v1483
  %v1574 = vsub.f32 %v1267, %v1486
  %v1575 = vsub.f32 %v1272, %v1489
  %v1576 = vsub.f32 %v1277, %v1492
  %v1577 = vsub.f32 %v1282, %v1495
  %v1578 = vsub.f32 %v1287, %v1498
  %v1579 = vsub.f32 %v1292, %v1501
  %v1580 = vsub.f32 %v1297, %v1504
  %v1581 = vsub.f32 %v1302, %v1507
  %v1582 = vsub.f32 %v1307, %v1510
  %v1583 = vsub.f32 %v1312, %v1513
  %v1584 = vsub.f32 %v1317, %v1516
  %v1585 = vsub.f32 %v1322, %v1519
  %v1586 = vsub.f32 %v1327, %v1522
  %v1587 = vmul.f32 %v1523, 1.442695
  %v1588 = vpow.pop %v1587
  %v1589 = vmul.f32 %v1524, 1.442695
  %v1590 = vpow.pop %v1589
  %v1591 = vmul.f32 %v1525, 1.442695
  %v1592 = vpow.pop %v1591
  %v1593 = vmul.f32 %v1526, 1.442695
  %v1594 = vpow.pop %v1593
  %v1595 = vmul.f32 %v1527, 1.442695
  %v1596 = vpow.pop %v1595
  %v1597 = vmul.f32 %v1528, 1.442695
  %v1598 = vpow.pop %v1597
  %v1599 = vmul.f32 %v1529, 1.442695
  %v1600 = vpow.pop %v1599
  %v1601 = vmul.f32 %v1530, 1.442695
  %v1602 = vpow.pop %v1601
  %v1603 = vmul.f32 %v1531, 1.442695
  %v1604 = vpow.pop %v1603
  %v1605 = vmul.f32 %v1532, 1.442695
  %v1606 = vpow.pop %v1605
  %v1607 = vmul.f32 %v1533, 1.442695
  %v1608 = vpow.pop %v1607
  %v1609 = vmul.f32 %v1534, 1.442695
  %v1610 = vpow.pop %v1609
  %v1611 = vmul.f32 %v1535, 1.442695
  %v1612 = vpow.pop %v1611
  %v1613 = vmul.f32 %v1536, 1.442695
  %v1614 = vpow.pop %v1613
  %v1615 = vmul.f32 %v1537, 1.442695
  %v1616 = vpow.pop %v1615
  %v1617 = vmul.f32 %v1538, 1.442695
  %v1618 = vpow.pop %v1617
  %v1619 = vmul.f32 %v1539, 1.442695
  %v1620 = vpow.pop %v1619
  %v1621 = vmul.f32 %v1540, 1.442695
  %v1622 = vpow.pop %v1621
  %v1623 = vmul.f32 %v1541, 1.442695
  %v1624 = vpow.pop %v1623
  %v1625 = vmul.f32 %v1542, 1.442695
  %v1626 = vpow.pop %v1625
  %v1627 = vmul.f32 %v1543, 1.442695
  %v1628 = vpow.pop %v1627
  %v1629 = vmul.f32 %v1544, 1.442695
  %v1630 = vpow.pop %v1629
  %v1631 = vmul.f32 %v1545, 1.442695
  %v1632 = vpow.pop %v1631
  %v1633 = vmul.f32 %v1546, 1.442695
  %v1634 = vpow.pop %v1633
  %v1635 = vmul.f32 %v1547, 1.442695
  %v1636 = vpow.pop %v1635
  %v1637 = vmul.f32 %v1548, 1.442695
  %v1638 = vpow.pop %v1637
  %v1639 = vmul.f32 %v1549, 1.442695
  %v1640 = vpow.pop %v1639
  %v1641 = vmul.f32 %v1550, 1.442695
  %v1642 = vpow.pop %v1641
  %v1643 = vmul.f32 %v1551, 1.442695
  %v1644 = vpow.pop %v1643
  %v1645 = vmul.f32 %v1552, 1.442695
  %v1646 = vpow.pop %v1645
  %v1647 = vmul.f32 %v1553, 1.442695
  %v1648 = vpow.pop %v1647
  %v1649 = vmul.f32 %v1554, 1.442695
  %v1650 = vpow.pop %v1649
  %v1651 = vmul.f32 %v1555, 1.442695
  %v1652 = vpow.pop %v1651
  %v1653 = vmul.f32 %v1556, 1.442695
  %v1654 = vpow.pop %v1653
  %v1655 = vmul.f32 %v1557, 1.442695
  %v1656 = vpow.pop %v1655
  %v1657 = vmul.f32 %v1558, 1.442695
  %v1658 = vpow.pop %v1657
  %v1659 = vmul.f32 %v1559, 1.442695
  %v1660 = vpow.pop %v1659
  %v1661 = vmul.f32 %v1560, 1.442695
  %v1662 = vpow.pop %v1661
  %v1663 = vmul.f32 %v1561, 1.442695
  %v1664 = vpow.pop %v1663
  %v1665 = vmul.f32 %v1562, 1.442695
  %v1666 = vpow.pop %v1665
  %v1667 = vmul.f32 %v1563, 1.442695
  %v1668 = vpow.pop %v1667
  %v1669 = vmul.f32 %v1564, 1.442695
  %v1670 = vpow.pop %v1669
  %v1671 = vmul.f32 %v1565, 1.442695
  %v1672 = vpow.pop %v1671
  %v1673 = vmul.f32 %v1566, 1.442695
  %v1674 = vpow.pop %v1673
  %v1675 = vmul.f32 %v1567, 1.442695
  %v1676 = vpow.pop %v1675
  %v1677 = vmul.f32 %v1568, 1.442695
  %v1678 = vpow.pop %v1677
  %v1679 = vmul.f32 %v1569, 1.442695
  %v1680 = vpow.pop %v1679
  %v1681 = vmul.f32 %v1570, 1.442695
  %v1682 = vpow.pop %v1681
  %v1683 = vmul.f32 %v1571, 1.442695
  %v1684 = vpow.pop %v1683
  %v1685 = vmul.f32 %v1572, 1.442695
  %v1686 = vpow.pop %v1685
  %v1687 = vmul.f32 %v1573, 1.442695
  %v1688 = vpow.pop %v1687
  %v1689 = vmul.f32 %v1574, 1.442695
  %v1690 = vpow.pop %v1689
  %v1691 = vmul.f32 %v1575, 1.442695
  %v1692 = vpow.pop %v1691
  %v1693 = vmul.f32 %v1576, 1.442695
  %v1694 = vpow.pop %v1693
  %v1695 = vmul.f32 %v1577, 1.442695
  %v1696 = vpow.pop %v1695
  %v1697 = vmul.f32 %v1578, 1.442695
  %v1698 = vpow.pop %v1697
  %v1699 = vmul.f32 %v1579, 1.442695
  %v1700 = vpow.pop %v1699
  %v1701 = vmul.f32 %v1580, 1.442695
  %v1702 = vpow.pop %v1701
  %v1703 = vmul.f32 %v1581, 1.442695
  %v1704 = vpow.pop %v1703
  %v1705 = vmul.f32 %v1582, 1.442695
  %v1706 = vpow.pop %v1705
  %v1707 = vmul.f32 %v1583, 1.442695
  %v1708 = vpow.pop %v1707
  %v1709 = vmul.f32 %v1584, 1.442695
  %v1710 = vpow.pop %v1709
  %v1711 = vmul.f32 %v1585, 1.442695
  %v1712 = vpow.pop %v1711
  %v1713 = vmul.f32 %v1586, 1.442695
  %v1714 = vpow.pop %v1713
  %v1715 = vsel %vm1330, %v1588, 0.0
  %1716 = vadd.xlane.f32.xlu0 %v1715
  %v1717 = vpop.xlane.xlu0 %1716
  %v1718 = vsel %vm1330, %v1590, 0.0
  %1719 = vadd.xlane.f32.xlu0 %v1718
  %v1720 = vpop.xlane.xlu0 %1719
  %v1721 = vsel %vm1330, %v1592, 0.0
  %1722 = vadd.xlane.f32.xlu0 %v1721
  %v1723 = vpop.xlane.xlu0 %1722
  %v1724 = vsel %vm1330, %v1594, 0.0
  %1725 = vadd.xlane.f32.xlu0 %v1724
  %v1726 = vpop.xlane.xlu0 %1725
  %v1727 = vsel %vm1330, %v1596, 0.0
  %1728 = vadd.xlane.f32.xlu0 %v1727
  %v1729 = vpop.xlane.xlu0 %1728
  %v1730 = vsel %vm1330, %v1598, 0.0
  %1731 = vadd.xlane.f32.xlu0 %v1730
  %v1732 = vpop.xlane.xlu0 %1731
  %v1733 = vsel %vm1330, %v1600, 0.0
  %1734 = vadd.xlane.f32.xlu0 %v1733
  %v1735 = vpop.xlane.xlu0 %1734
  %v1736 = vsel %vm1330, %v1602, 0.0
  %1737 = vadd.xlane.f32.xlu0 %v1736
  %v1738 = vpop.xlane.xlu0 %1737
  %v1739 = vsel %vm1330, %v1604, 0.0
  %1740 = vadd.xlane.f32.xlu0 %v1739
  %v1741 = vpop.xlane.xlu0 %1740
  %v1742 = vsel %vm1330, %v1606, 0.0
  %1743 = vadd.xlane.f32.xlu0 %v1742
  %v1744 = vpop.xlane.xlu0 %1743
  %v1745 = vsel %vm1330, %v1608, 0.0
  %1746 = vadd.xlane.f32.xlu0 %v1745
  %v1747 = vpop.xlane.xlu0 %1746
  %v1748 = vsel %vm1330, %v1610, 0.0
  %1749 = vadd.xlane.f32.xlu0 %v1748
  %v1750 = vpop.xlane.xlu0 %1749
  %v1751 = vsel %vm1330, %v1612, 0.0
  %1752 = vadd.xlane.f32.xlu0 %v1751
  %v1753 = vpop.xlane.xlu0 %1752
  %v1754 = vsel %vm1330, %v1614, 0.0
  %1755 = vadd.xlane.f32.xlu0 %v1754
  %v1756 = vpop.xlane.xlu0 %1755
  %v1757 = vsel %vm1330, %v1616, 0.0
  %1758 = vadd.xlane.f32.xlu0 %v1757
  %v1759 = vpop.xlane.xlu0 %1758
  %v1760 = vsel %vm1330, %v1618, 0.0
  %1761 = vadd.xlane.f32.xlu0 %v1760
  %v1762 = vpop.xlane.xlu0 %1761
  %v1763 = vsel %vm1330, %v1620, 0.0
  %1764 = vadd.xlane.f32.xlu0 %v1763
  %v1765 = vpop.xlane.xlu0 %1764
  %v1766 = vsel %vm1330, %v1622, 0.0
  %1767 = vadd.xlane.f32.xlu0 %v1766
  %v1768 = vpop.xlane.xlu0 %1767
  %v1769 = vsel %vm1330, %v1624, 0.0
  %1770 = vadd.xlane.f32.xlu0 %v1769
  %v1771 = vpop.xlane.xlu0 %1770
  %v1772 = vsel %vm1330, %v1626, 0.0
  %1773 = vadd.xlane.f32.xlu0 %v1772
  %v1774 = vpop.xlane.xlu0 %1773
  %v1775 = vsel %vm1330, %v1628, 0.0
  %1776 = vadd.xlane.f32.xlu0 %v1775
  %v1777 = vpop.xlane.xlu0 %1776
  %v1778 = vsel %vm1330, %v1630, 0.0
  %1779 = vadd.xlane.f32.xlu0 %v1778
  %v1780 = vpop.xlane.xlu0 %1779
  %v1781 = vsel %vm1330, %v1632, 0.0
  %1782 = vadd.xlane.f32.xlu0 %v1781
  %v1783 = vpop.xlane.xlu0 %1782
  %v1784 = vsel %vm1330, %v1634, 0.0
  %1785 = vadd.xlane.f32.xlu0 %v1784
  %v1786 = vpop.xlane.xlu0 %1785
  %v1787 = vsel %vm1330, %v1636, 0.0
  %1788 = vadd.xlane.f32.xlu0 %v1787
  %v1789 = vpop.xlane.xlu0 %1788
  %v1790 = vsel %vm1330, %v1638, 0.0
  %1791 = vadd.xlane.f32.xlu0 %v1790
  %v1792 = vpop.xlane.xlu0 %1791
  %v1793 = vsel %vm1330, %v1640, 0.0
  %1794 = vadd.xlane.f32.xlu0 %v1793
  %v1795 = vpop.xlane.xlu0 %1794
  %v1796 = vsel %vm1330, %v1642, 0.0
  %1797 = vadd.xlane.f32.xlu0 %v1796
  %v1798 = vpop.xlane.xlu0 %1797
  %v1799 = vsel %vm1330, %v1644, 0.0
  %1800 = vadd.xlane.f32.xlu0 %v1799
  %v1801 = vpop.xlane.xlu0 %1800
  %v1802 = vsel %vm1330, %v1646, 0.0
  %1803 = vadd.xlane.f32.xlu0 %v1802
  %v1804 = vpop.xlane.xlu0 %1803
  %v1805 = vsel %vm1330, %v1648, 0.0
  %1806 = vadd.xlane.f32.xlu0 %v1805
  %v1807 = vpop.xlane.xlu0 %1806
  %v1808 = vsel %vm1330, %v1650, 0.0
  %1809 = vadd.xlane.f32.xlu0 %v1808
  %v1810 = vpop.xlane.xlu0 %1809
  %v1811 = vsel %vm1330, %v1652, 0.0
  %1812 = vadd.xlane.f32.xlu0 %v1811
  %v1813 = vpop.xlane.xlu0 %1812
  %v1814 = vsel %vm1330, %v1654, 0.0
  %1815 = vadd.xlane.f32.xlu0 %v1814
  %v1816 = vpop.xlane.xlu0 %1815
  %v1817 = vsel %vm1330, %v1656, 0.0
  %1818 = vadd.xlane.f32.xlu0 %v1817
  %v1819 = vpop.xlane.xlu0 %1818
  %v1820 = vsel %vm1330, %v1658, 0.0
  %1821 = vadd.xlane.f32.xlu0 %v1820
  %v1822 = vpop.xlane.xlu0 %1821
  %v1823 = vsel %vm1330, %v1660, 0.0
  %1824 = vadd.xlane.f32.xlu0 %v1823
  %v1825 = vpop.xlane.xlu0 %1824
  %v1826 = vsel %vm1330, %v1662, 0.0
  %1827 = vadd.xlane.f32.xlu0 %v1826
  %v1828 = vpop.xlane.xlu0 %1827
  %v1829 = vsel %vm1330, %v1664, 0.0
  %1830 = vadd.xlane.f32.xlu0 %v1829
  %v1831 = vpop.xlane.xlu0 %1830
  %v1832 = vsel %vm1330, %v1666, 0.0
  %1833 = vadd.xlane.f32.xlu0 %v1832
  %v1834 = vpop.xlane.xlu0 %1833
  %v1835 = vsel %vm1330, %v1668, 0.0
  %1836 = vadd.xlane.f32.xlu0 %v1835
  %v1837 = vpop.xlane.xlu0 %1836
  %v1838 = vsel %vm1330, %v1670, 0.0
  %1839 = vadd.xlane.f32.xlu0 %v1838
  %v1840 = vpop.xlane.xlu0 %1839
  %v1841 = vsel %vm1330, %v1672, 0.0
  %1842 = vadd.xlane.f32.xlu0 %v1841
  %v1843 = vpop.xlane.xlu0 %1842
  %v1844 = vsel %vm1330, %v1674, 0.0
  %1845 = vadd.xlane.f32.xlu0 %v1844
  %v1846 = vpop.xlane.xlu0 %1845
  %v1847 = vsel %vm1330, %v1676, 0.0
  %1848 = vadd.xlane.f32.xlu0 %v1847
  %v1849 = vpop.xlane.xlu0 %1848
  %v1850 = vsel %vm1330, %v1678, 0.0
  %1851 = vadd.xlane.f32.xlu0 %v1850
  %v1852 = vpop.xlane.xlu0 %1851
  %v1853 = vsel %vm1330, %v1680, 0.0
  %1854 = vadd.xlane.f32.xlu0 %v1853
  %v1855 = vpop.xlane.xlu0 %1854
  %v1856 = vsel %vm1330, %v1682, 0.0
  %1857 = vadd.xlane.f32.xlu0 %v1856
  %v1858 = vpop.xlane.xlu0 %1857
  %v1859 = vsel %vm1330, %v1684, 0.0
  %1860 = vadd.xlane.f32.xlu0 %v1859
  %v1861 = vpop.xlane.xlu0 %1860
  %v1862 = vsel %vm1330, %v1686, 0.0
  %1863 = vadd.xlane.f32.xlu0 %v1862
  %v1864 = vpop.xlane.xlu0 %1863
  %v1865 = vsel %vm1330, %v1688, 0.0
  %1866 = vadd.xlane.f32.xlu0 %v1865
  %v1867 = vpop.xlane.xlu0 %1866
  %v1868 = vsel %vm1330, %v1690, 0.0
  %1869 = vadd.xlane.f32.xlu0 %v1868
  %v1870 = vpop.xlane.xlu0 %1869
  %v1871 = vsel %vm1330, %v1692, 0.0
  %1872 = vadd.xlane.f32.xlu0 %v1871
  %v1873 = vpop.xlane.xlu0 %1872
  %v1874 = vsel %vm1330, %v1694, 0.0
  %1875 = vadd.xlane.f32.xlu0 %v1874
  %v1876 = vpop.xlane.xlu0 %1875
  %v1877 = vsel %vm1330, %v1696, 0.0
  %1878 = vadd.xlane.f32.xlu0 %v1877
  %v1879 = vpop.xlane.xlu0 %1878
  %v1880 = vsel %vm1330, %v1698, 0.0
  %1881 = vadd.xlane.f32.xlu0 %v1880
  %v1882 = vpop.xlane.xlu0 %1881
  %v1883 = vsel %vm1330, %v1700, 0.0
  %1884 = vadd.xlane.f32.xlu0 %v1883
  %v1885 = vpop.xlane.xlu0 %1884
  %v1886 = vsel %vm1330, %v1702, 0.0
  %1887 = vadd.xlane.f32.xlu0 %v1886
  %v1888 = vpop.xlane.xlu0 %1887
  %v1889 = vsel %vm1330, %v1704, 0.0
  %1890 = vadd.xlane.f32.xlu0 %v1889
  %v1891 = vpop.xlane.xlu0 %1890
  %v1892 = vsel %vm1330, %v1706, 0.0
  %1893 = vadd.xlane.f32.xlu0 %v1892
  %v1894 = vpop.xlane.xlu0 %1893
  %v1895 = vsel %vm1330, %v1708, 0.0
  %1896 = vadd.xlane.f32.xlu0 %v1895
  %v1897 = vpop.xlane.xlu0 %1896
  %v1898 = vsel %vm1330, %v1710, 0.0
  %1899 = vadd.xlane.f32.xlu0 %v1898
  %v1900 = vpop.xlane.xlu0 %1899
  %v1901 = vsel %vm1330, %v1712, 0.0
  %1902 = vadd.xlane.f32.xlu0 %v1901
  %v1903 = vpop.xlane.xlu0 %1902
  %v1904 = vsel %vm1330, %v1714, 0.0
  %1905 = vadd.xlane.f32.xlu0 %v1904
  %v1906 = vpop.xlane.xlu0 %1905
  %v1907 = vrcp.pop %v1717
  %v1908 = vmul.f32 %v1588, %v1907
  %v1909 = vrcp.pop %v1720
  %v1910 = vmul.f32 %v1590, %v1909
  %v1911 = vrcp.pop %v1723
  %v1912 = vmul.f32 %v1592, %v1911
  %v1913 = vrcp.pop %v1726
  %v1914 = vmul.f32 %v1594, %v1913
  %v1915 = vrcp.pop %v1729
  %v1916 = vmul.f32 %v1596, %v1915
  %v1917 = vrcp.pop %v1732
  %v1918 = vmul.f32 %v1598, %v1917
  %v1919 = vrcp.pop %v1735
  %v1920 = vmul.f32 %v1600, %v1919
  %v1921 = vrcp.pop %v1738
  %v1922 = vmul.f32 %v1602, %v1921
  %v1923 = vrcp.pop %v1741
  %v1924 = vmul.f32 %v1604, %v1923
  %v1925 = vrcp.pop %v1744
  %v1926 = vmul.f32 %v1606, %v1925
  %v1927 = vrcp.pop %v1747
  %v1928 = vmul.f32 %v1608, %v1927
  %v1929 = vrcp.pop %v1750
  %v1930 = vmul.f32 %v1610, %v1929
  %v1931 = vrcp.pop %v1753
  %v1932 = vmul.f32 %v1612, %v1931
  %v1933 = vrcp.pop %v1756
  %v1934 = vmul.f32 %v1614, %v1933
  %v1935 = vrcp.pop %v1759
  %v1936 = vmul.f32 %v1616, %v1935
  %v1937 = vrcp.pop %v1762
  %v1938 = vmul.f32 %v1618, %v1937
  %v1939 = vrcp.pop %v1765
  %v1940 = vmul.f32 %v1620, %v1939
  %v1941 = vrcp.pop %v1768
  %v1942 = vmul.f32 %v1622, %v1941
  %v1943 = vrcp.pop %v1771
  %v1944 = vmul.f32 %v1624, %v1943
  %v1945 = vrcp.pop %v1774
  %v1946 = vmul.f32 %v1626, %v1945
  %v1947 = vrcp.pop %v1777
  %v1948 = vmul.f32 %v1628, %v1947
  %v1949 = vrcp.pop %v1780
  %v1950 = vmul.f32 %v1630, %v1949
  %v1951 = vrcp.pop %v1783
  %v1952 = vmul.f32 %v1632, %v1951
  %v1953 = vrcp.pop %v1786
  %v1954 = vmul.f32 %v1634, %v1953
  %v1955 = vrcp.pop %v1789
  %v1956 = vmul.f32 %v1636, %v1955
  %v1957 = vrcp.pop %v1792
  %v1958 = vmul.f32 %v1638, %v1957
  %v1959 = vrcp.pop %v1795
  %v1960 = vmul.f32 %v1640, %v1959
  %v1961 = vrcp.pop %v1798
  %v1962 = vmul.f32 %v1642, %v1961
  %v1963 = vrcp.pop %v1801
  %v1964 = vmul.f32 %v1644, %v1963
  %v1965 = vrcp.pop %v1804
  %v1966 = vmul.f32 %v1646, %v1965
  %v1967 = vrcp.pop %v1807
  %v1968 = vmul.f32 %v1648, %v1967
  %v1969 = vrcp.pop %v1810
  %v1970 = vmul.f32 %v1650, %v1969
  %v1971 = vrcp.pop %v1813
  %v1972 = vmul.f32 %v1652, %v1971
  %v1973 = vrcp.pop %v1816
  %v1974 = vmul.f32 %v1654, %v1973
  %v1975 = vrcp.pop %v1819
  %v1976 = vmul.f32 %v1656, %v1975
  %v1977 = vrcp.pop %v1822
  %v1978 = vmul.f32 %v1658, %v1977
  %v1979 = vrcp.pop %v1825
  %v1980 = vmul.f32 %v1660, %v1979
  %v1981 = vrcp.pop %v1828
  %v1982 = vmul.f32 %v1662, %v1981
  %v1983 = vrcp.pop %v1831
  %v1984 = vmul.f32 %v1664, %v1983
  %v1985 = vrcp.pop %v1834
  %v1986 = vmul.f32 %v1666, %v1985
  %v1987 = vrcp.pop %v1837
  %v1988 = vmul.f32 %v1668, %v1987
  %v1989 = vrcp.pop %v1840
  %v1990 = vmul.f32 %v1670, %v1989
  %v1991 = vrcp.pop %v1843
  %v1992 = vmul.f32 %v1672, %v1991
  %v1993 = vrcp.pop %v1846
  %v1994 = vmul.f32 %v1674, %v1993
  %v1995 = vrcp.pop %v1849
  %v1996 = vmul.f32 %v1676, %v1995
  %v1997 = vrcp.pop %v1852
  %v1998 = vmul.f32 %v1678, %v1997
  %v1999 = vrcp.pop %v1855
  %v2000 = vmul.f32 %v1680, %v1999
  %v2001 = vrcp.pop %v1858
  %v2002 = vmul.f32 %v1682, %v2001
  %v2003 = vrcp.pop %v1861
  %v2004 = vmul.f32 %v1684, %v2003
  %v2005 = vrcp.pop %v1864
  %v2006 = vmul.f32 %v1686, %v2005
  %v2007 = vrcp.pop %v1867
  %v2008 = vmul.f32 %v1688, %v2007
  %v2009 = vrcp.pop %v1870
  %v2010 = vmul.f32 %v1690, %v2009
  %v2011 = vrcp.pop %v1873
  %v2012 = vmul.f32 %v1692, %v2011
  %v2013 = vrcp.pop %v1876
  %v2014 = vmul.f32 %v1694, %v2013
  %v2015 = vrcp.pop %v1879
  %v2016 = vmul.f32 %v1696, %v2015
  %v2017 = vrcp.pop %v1882
  %v2018 = vmul.f32 %v1698, %v2017
  %v2019 = vrcp.pop %v1885
  %v2020 = vmul.f32 %v1700, %v2019
  %v2021 = vrcp.pop %v1888
  %v2022 = vmul.f32 %v1702, %v2021
  %v2023 = vrcp.pop %v1891
  %v2024 = vmul.f32 %v1704, %v2023
  %v2025 = vrcp.pop %v1894
  %v2026 = vmul.f32 %v1706, %v2025
  %v2027 = vrcp.pop %v1897
  %v2028 = vmul.f32 %v1708, %v2027
  %v2029 = vrcp.pop %v1900
  %v2030 = vmul.f32 %v1710, %v2029
  %v2031 = vrcp.pop %v1903
  %v2032 = vmul.f32 %v1712, %v2031
  %v2033 = vrcp.pop %v1906
  %v2034 = vmul.f32 %v1714, %v2033
  %2035 = vst.msk [vmem:[%s5] sm:$0xff] %vm1330, %v1908
  %2036 = vst.msk [vmem:[%s5 + $0x8] sm:$0xff] %vm1330, %v1910
  %2037 = vst.msk [vmem:[%s5 + $0x10] sm:$0xff] %vm1330, %v1912
  %2038 = vst.msk [vmem:[%s5 + $0x18] sm:$0xff] %vm1330, %v1914
  %2039 = vst.msk [vmem:[%s5 + $0x20] sm:$0xff] %vm1330, %v1916
  %2040 = vst.msk [vmem:[%s5 + $0x28] sm:$0xff] %vm1330, %v1918
  %2041 = vst.msk [vmem:[%s5 + $0x30] sm:$0xff] %vm1330, %v1920
  %2042 = vst.msk [vmem:[%s5 + $0x38] sm:$0xff] %vm1330, %v1922
  %2043 = vst.msk [vmem:[%s5 + $0x40] sm:$0xff] %vm1330, %v1924
  %2044 = vst.msk [vmem:[%s5 + $0x48] sm:$0xff] %vm1330, %v1926
  %2045 = vst.msk [vmem:[%s5 + $0x50] sm:$0xff] %vm1330, %v1928
  %2046 = vst.msk [vmem:[%s5 + $0x58] sm:$0xff] %vm1330, %v1930
  %2047 = vst.msk [vmem:[%s5 + $0x60] sm:$0xff] %vm1330, %v1932
  %2048 = vst.msk [vmem:[%s5 + $0x68] sm:$0xff] %vm1330, %v1934
  %2049 = vst.msk [vmem:[%s5 + $0x70] sm:$0xff] %vm1330, %v1936
  %2050 = vst.msk [vmem:[%s5 + $0x78] sm:$0xff] %vm1330, %v1938
  %2051 = vst.msk [vmem:[%s5 + $0x80] sm:$0xff] %vm1330, %v1940
  %2052 = vst.msk [vmem:[%s5 + $0x88] sm:$0xff] %vm1330, %v1942
  %2053 = vst.msk [vmem:[%s5 + $0x90] sm:$0xff] %vm1330, %v1944
  %2054 = vst.msk [vmem:[%s5 + $0x98] sm:$0xff] %vm1330, %v1946
  %2055 = vst.msk [vmem:[%s5 + $0xa0] sm:$0xff] %vm1330, %v1948
  %2056 = vst.msk [vmem:[%s5 + $0xa8] sm:$0xff] %vm1330, %v1950
  %2057 = vst.msk [vmem:[%s5 + $0xb0] sm:$0xff] %vm1330, %v1952
  %2058 = vst.msk [vmem:[%s5 + $0xb8] sm:$0xff] %vm1330, %v1954
  %2059 = vst.msk [vmem:[%s5 + $0xc0] sm:$0xff] %vm1330, %v1956
  %2060 = vst.msk [vmem:[%s5 + $0xc8] sm:$0xff] %vm1330, %v1958
  %2061 = vst.msk [vmem:[%s5 + $0xd0] sm:$0xff] %vm1330, %v1960
  %2062 = vst.msk [vmem:[%s5 + $0xd8] sm:$0xff] %vm1330, %v1962
  %2063 = vst.msk [vmem:[%s5 + $0xe0] sm:$0xff] %vm1330, %v1964
  %2064 = vst.msk [vmem:[%s5 + $0xe8] sm:$0xff] %vm1330, %v1966
  %2065 = vst.msk [vmem:[%s5 + $0xf0] sm:$0xff] %vm1330, %v1968
  %2066 = vst.msk [vmem:[%s5 + $0xf8] sm:$0xff] %vm1330, %v1970
  %2067 = vst.msk [vmem:[%s5 + $0x100] sm:$0xff] %vm1330, %v1972
  %2068 = vst.msk [vmem:[%s5 + $0x108] sm:$0xff] %vm1330, %v1974
  %2069 = vst.msk [vmem:[%s5 + $0x110] sm:$0xff] %vm1330, %v1976
  %2070 = vst.msk [vmem:[%s5 + $0x118] sm:$0xff] %vm1330, %v1978
  %2071 = vst.msk [vmem:[%s5 + $0x120] sm:$0xff] %vm1330, %v1980
  %2072 = vst.msk [vmem:[%s5 + $0x128] sm:$0xff] %vm1330, %v1982
  %2073 = vst.msk [vmem:[%s5 + $0x130] sm:$0xff] %vm1330, %v1984
  %2074 = vst.msk [vmem:[%s5 + $0x138] sm:$0xff] %vm1330, %v1986
  %2075 = vst.msk [vmem:[%s5 + $0x140] sm:$0xff] %vm1330, %v1988
  %2076 = vst.msk [vmem:[%s5 + $0x148] sm:$0xff] %vm1330, %v1990
  %2077 = vst.msk [vmem:[%s5 + $0x150] sm:$0xff] %vm1330, %v1992
  %2078 = vst.msk [vmem:[%s5 + $0x158] sm:$0xff] %vm1330, %v1994
  %2079 = vst.msk [vmem:[%s5 + $0x160] sm:$0xff] %vm1330, %v1996
  %2080 = vst.msk [vmem:[%s5 + $0x168] sm:$0xff] %vm1330, %v1998
  %2081 = vst.msk [vmem:[%s5 + $0x170] sm:$0xff] %vm1330, %v2000
  %2082 = vst.msk [vmem:[%s5 + $0x178] sm:$0xff] %vm1330, %v2002
  %2083 = vst.msk [vmem:[%s5 + $0x180] sm:$0xff] %vm1330, %v2004
  %2084 = vst.msk [vmem:[%s5 + $0x188] sm:$0xff] %vm1330, %v2006
  %2085 = vst.msk [vmem:[%s5 + $0x190] sm:$0xff] %vm1330, %v2008
  %2086 = vst.msk [vmem:[%s5 + $0x198] sm:$0xff] %vm1330, %v2010
  %2087 = vst.msk [vmem:[%s5 + $0x1a0] sm:$0xff] %vm1330, %v2012
  %2088 = vst.msk [vmem:[%s5 + $0x1a8] sm:$0xff] %vm1330, %v2014
  %2089 = vst.msk [vmem:[%s5 + $0x1b0] sm:$0xff] %vm1330, %v2016
  %2090 = vst.msk [vmem:[%s5 + $0x1b8] sm:$0xff] %vm1330, %v2018
  %2091 = vst.msk [vmem:[%s5 + $0x1c0] sm:$0xff] %vm1330, %v2020
  %2092 = vst.msk [vmem:[%s5 + $0x1c8] sm:$0xff] %vm1330, %v2022
  %2093 = vst.msk [vmem:[%s5 + $0x1d0] sm:$0xff] %vm1330, %v2024
  %2094 = vst.msk [vmem:[%s5 + $0x1d8] sm:$0xff] %vm1330, %v2026
  %2095 = vst.msk [vmem:[%s5 + $0x1e0] sm:$0xff] %vm1330, %v2028
  %2096 = vst.msk [vmem:[%s5 + $0x1e8] sm:$0xff] %vm1330, %v2030
  %2097 = vst.msk [vmem:[%s5 + $0x1f0] sm:$0xff] %vm1330, %v2032
  %2098 = vst.msk [vmem:[%s5 + $0x1f8] sm:$0xff] %vm1330, %v2034
  // Predicated region
  $region22: #{tpu_custom_call.1} parent=0 // pred_check
    _
  $region23: #{tpu_custom_call.1} parent=0 // pred_check_branch
    %2100 = sbr.rel (0) target = $region25
  $region24: #{tpu_custom_call.1} parent=0 // pred_region
    _
  $region25: #{tpu_custom_call.1} parent=0 // pred_fallthru
    _
  // Predicated region
  $region26: #{tpu_custom_call.1} parent=0 // pred_check
    _
  $region27: #{tpu_custom_call.1} parent=0 // pred_check_branch
    %2102 = sbr.rel (0) target = $region29
  $region28: #{tpu_custom_call.1} parent=0 // pred_region
    _
  $region29: #{tpu_custom_call.1} parent=0 // pred_fallthru
    _

</llo_original>
